<compile_context>
chip_gen: v5e
topology: v5e:2x2
jax: 0.10.0
libtpu: 0.0.40
codegen_flags: <defaults>
</compile_context>

<pallas_src>
import functools

import jax
import jax.numpy as jnp
from jax.experimental import pallas as pl
from jax.experimental.pallas import tpu as pltpu

LN_EPS = 1e-5
MAX_TILE_B = 4096                 # per-tile batch cap (sized for v7x 64 MiB VMEM)
VMEM_LIMIT_BYTES = 48 * 1024 * 1024


# ----------------------------------------------------------------------------
# Static layer description
# ----------------------------------------------------------------------------
def _layer_dims(input_size):
    """(fan_in, fan_out, has_layernorm) for each of the 8 Linear layers."""
    enc = [(input_size, 80, True), (80, 64, True), (64, 48, True), (48, 2, False)]
    dec = [(2, 48, True), (48, 64, True), (64, 80, True), (80, input_size, False)]
    return enc + dec


def _pad8(n):
    return ((n + 7) // 8) * 8


def _vec_layout(dims):
    """Sublane-aligned row offsets of bias / gamma / beta in the packed vector."""
    offs = []
    off = 0
    for _, fo, has_ln in dims:
        slot = _pad8(fo)
        b_off = off
        off += slot
        if has_ln:
            g_off = off
            off += slot
            be_off = off
            off += slot
        else:
            g_off = be_off = None
        offs.append((b_off, g_off, be_off))
    return offs, off


# ----------------------------------------------------------------------------
# Kernel
# ----------------------------------------------------------------------------
def _layernorm(h, gamma, beta, f):
    """Two-pass LayerNorm over the feature (sublane) axis, f32, biased variance."""
    inv_f = jnp.float32(1.0 / f)
    mu = jnp.sum(h, axis=0, keepdims=True) * inv_f          # (1, nb)
    c = h - mu
    var = jnp.sum(c * c, axis=0, keepdims=True) * inv_f     # (1, nb)
    return c * jax.lax.rsqrt(var + jnp.float32(LN_EPS)) * gamma + beta


def _make_wae_kernel(input_size):
    dims = _layer_dims(input_size)
    offs, _ = _vec_layout(dims)
    n_layers = len(dims)

    def kernel(*refs):
        # refs = [x_t, W0..W7, packed_vec, out]
        x_ref = refs[0]
        w_refs = refs[1:1 + n_layers]
        vec_ref = refs[1 + n_layers]
        out_ref = refs[2 + n_layers]

        vec = vec_ref[...]                           # (total_rows, 1), f32
        h = x_ref[...].astype(jnp.float32)           # (input_size, nb) feature-major
        z = None
        for li, ((_, fo, has_ln), (b_off, g_off, be_off)) in enumerate(zip(dims, offs)):
            w = w_refs[li][...]                      # (fo, fi), bf16 (or f32 for layer 3)
            hm = h if w.dtype == jnp.float32 else h.astype(w.dtype)
            h = jnp.dot(w, hm, preferred_element_type=jnp.float32)   # (fo, nb), f32 acc
            h = h + vec[b_off:b_off + fo, :]         # bias (fo, 1), lane broadcast
            if has_ln:
                gamma = vec[g_off:g_off + fo, :]
                beta = vec[be_off:be_off + fo, :]
                h = _layernorm(h, gamma, beta, fo)
                h = jnp.maximum(h, 0.0)              # ReLU
            if li == 3:                              # encoder output (latent z)
                z = h

        # Softmax over the feature axis (PyTorch dim=1) == sublane axis here.
        m = jnp.max(h, axis=0, keepdims=True)
        e = jnp.exp(h - m)
        denom = jnp.sum(e, axis=0, keepdims=True)
        x_recon = e * (1.0 / denom)                  # exact normalization

        # Merged lane-dense output: rows [0, input_size) = x_recon, last 2 rows = z.
        out_ref[0:input_size, :] = x_recon.astype(out_ref.dtype)
        out_ref[input_size:input_size + 2, :] = z.astype(out_ref.dtype)

    return kernel


# ----------------------------------------------------------------------------
# Wrapper
# ----------------------------------------------------------------------------
def _pick_tile_b(B):
    if B <= 128:
        return B                                  # single full-extent tile
    # >=2 grid steps (v7x megacore), lane-aligned tiles, capped by VMEM budget.
    half = (B + 1) // 2
    tile = ((half + 127) // 128) * 128
    return min(tile, MAX_TILE_B)


@functools.partial(jax.jit, static_argnames=("matmul_dtype", "tile_b"))
def wae_forward(x, weights, packed_vec, *, matmul_dtype=jnp.bfloat16, tile_b=None):
    weights = tuple(weights)
    B, input_size = x.shape
    dims = _layer_dims(input_size)
    offs, total = _vec_layout(dims)
    assert packed_vec.shape == (total, 1)
    assert len(weights) == len(dims)
    for w, (fi, fo, _) in zip(weights, dims):
        assert w.shape == (fo, fi)

    # One-time wrapper-side operand casts.  Layer 3 (48 -> 2, produces z) stays f32.
    mm_weights = tuple(
        w if (li == 3 or matmul_dtype == jnp.float32) else w.astype(matmul_dtype)
        for li, w in enumerate(weights))

    if tile_b is None:
        tile_b = _pick_tile_b(B)
    grid = (pl.cdiv(B, tile_b),)

    kernel = _make_wae_kernel(input_size)

    # Wrapper-side layout plumbing: batch on the lane axis inside the kernel.
    x_t = x.T                                         # (input_size, B)

    x_spec = pl.BlockSpec((input_size, tile_b), lambda i: (0, i))
    w_specs = [pl.BlockSpec(w.shape, lambda i: (0, 0)) for w in mm_weights]
    vec_spec = pl.BlockSpec(packed_vec.shape, lambda i: (0, 0))
    out_spec = pl.BlockSpec((input_size + 2, tile_b), lambda i: (0, i))
    out_shape = jax.ShapeDtypeStruct((input_size + 2, B), jnp.float32)

    out = pl.pallas_call(
        kernel,
        out_shape=out_shape,
        grid_spec=pltpu.PrefetchScalarGridSpec(
            num_scalar_prefetch=0,
            grid=grid,
            in_specs=[x_spec] + w_specs + [vec_spec],
            out_specs=out_spec,
        ),
        compiler_params=pltpu.CompilerParams(
            dimension_semantics=("parallel",),        # batch tiles shard across v7x's 2 TCs
            vmem_limit_bytes=VMEM_LIMIT_BYTES,
        ),
    )(x_t, *mm_weights, packed_vec)

    x_recon = out[:input_size, :].T                   # (B, input_size)
    z = out[input_size:, :].T                         # (B, 2)
    return x_recon, z


# ----------------------------------------------------------------------------
# Parameters (synthetic, deterministic) + plain-JAX reference
# ----------------------------------------------------------------------------
def make_wae_params(input_size, key):
    """Weights in PyTorch (out, in) layout; bias/gamma/beta packed along sublanes."""
    dims = _layer_dims(input_size)
    weights = []
    vec_parts = []
    keys = jax.random.split(key, len(dims))

    def pad_rows(v):                                  # (fo, 1) -> (pad8(fo), 1)
        fo = v.shape[0]
        return jnp.pad(v, ((0, _pad8(fo) - fo), (0, 0)))

    for k, (fi, fo, has_ln) in zip(keys, dims):
        kw, kb = jax.random.split(k)
        w = jax.random.normal(kw, (fo, fi), jnp.float32) * 0.1
        b = jax.random.normal(kb, (fo, 1), jnp.float32) * 0.01
        weights.append(w)
        vec_parts.append(pad_rows(b))
        if has_ln:
            vec_parts.append(pad_rows(jnp.ones((fo, 1), jnp.float32)))   # gamma
            vec_parts.append(pad_rows(jnp.zeros((fo, 1), jnp.float32)))  # beta
    packed = jnp.concatenate(vec_parts, axis=0)       # (total_rows, 1)
    return weights, packed


def wae_reference(x, weights, packed):
    """Plain-JAX reference matching PyTorch semantics (two-pass LN, exact softmax)."""
    input_size = x.shape[1]
    dims = _layer_dims(input_size)
    offs, _ = _vec_layout(dims)
    h = x.astype(jnp.float32)
    z = None
    for li, ((_, fo, has_ln), (bo, go, beo)) in enumerate(zip(dims, offs)):
        b = packed[bo:bo + fo, 0]
        h = h @ weights[li].T + b
        if has_ln:
            g = packed[go:go + fo, 0]
            be = packed[beo:beo + fo, 0]
            mu = jnp.mean(h, axis=-1, keepdims=True)
            var = jnp.mean((h - mu) ** 2, axis=-1, keepdims=True)
            h = (h - mu) / jnp.sqrt(var + LN_EPS) * g + be
            h = jnp.maximum(h, 0.0)
        if li == 3:
            z = h
    x_recon = jax.nn.softmax(h, axis=1)
    return x_recon, z


# ----------------------------------------------------------------------------
# Smoke test
# ----------------------------------------------------------------------------
if __name__ == "__main__":
    key = jax.random.PRNGKey(0)
    k_x, k_p = jax.random.split(key)

    B, INPUT_SIZE = 8, 16
    x = jax.random.normal(k_x, (B, INPUT_SIZE), jnp.float32)
    weights, packed = make_wae_params(INPUT_SIZE, k_p)

    xr_ref, z_ref = wae_reference(x, weights, packed)

    # Exact f32 MXU path (should track the PyTorch reference numerics tightly).
    xr_f32, z_f32 = wae_forward(x, weights, packed, matmul_dtype=jnp.float32)
    jax.block_until_ready((xr_f32, z_f32))
    assert xr_f32.shape == (B, INPUT_SIZE) and z_f32.shape == (B, 2)
    assert jnp.allclose(z_f32, z_ref, atol=1e-4, rtol=1e-4)
    assert jnp.allclose(xr_f32, xr_ref, atol=1e-4, rtol=1e-4)
    assert jnp.allclose(jnp.sum(xr_f32, axis=1), 1.0, atol=1e-5)  # exact softmax norm

    # Default fast path: bf16 MXU operands, f32 accumulation (layer->z stays f32).
    xr_bf16, z_bf16 = wae_forward(x, weights, packed)
    jax.block_until_ready((xr_bf16, z_bf16))
    assert jnp.all(jnp.isfinite(xr_bf16)) and jnp.all(jnp.isfinite(z_bf16))
    assert jnp.allclose(xr_bf16, xr_ref, atol=1e-1, rtol=1e-1)
    assert jnp.allclose(z_bf16, z_ref, atol=1e-1, rtol=1e-1)

    print("KERNEL_OK")
</pallas_src>

<mosaic_0001>
module attributes {stable_mosaic.version = 11 : i64} {
  func.func @kernel(%arg0: i32, %arg1: memref<16x8xf32, #tpu.memory_space<vmem>>, %arg2: memref<80x16xf32, #tpu.memory_space<vmem>>, %arg3: memref<64x80xf32, #tpu.memory_space<vmem>>, %arg4: memref<48x64xf32, #tpu.memory_space<vmem>>, %arg5: memref<2x48xf32, #tpu.memory_space<vmem>>, %arg6: memref<48x2xf32, #tpu.memory_space<vmem>>, %arg7: memref<64x48xf32, #tpu.memory_space<vmem>>, %arg8: memref<80x64xf32, #tpu.memory_space<vmem>>, %arg9: memref<16x80xf32, #tpu.memory_space<vmem>>, %arg10: memref<1176x1xf32, #tpu.memory_space<vmem>>, %arg11: memref<18x8xf32, #tpu.memory_space<vmem>>) attributes {dimension_semantics = [#tpu.dimension_semantics<parallel>], iteration_bounds = array<i64: 1>, scalar_prefetch = 0 : i64, scratch_operands = 0 : i64, tpu.core_type = #tpu.core_type<tc>, window_params = [{transform_indices = @transform_0, window_bounds = array<i64: 16, 8>}, {pipeline_mode = #tpu.pipeline_mode<synchronous>, transform_indices = @transform_1, window_bounds = array<i64: 80, 16>}, {pipeline_mode = #tpu.pipeline_mode<synchronous>, transform_indices = @transform_2, window_bounds = array<i64: 64, 80>}, {pipeline_mode = #tpu.pipeline_mode<synchronous>, transform_indices = @transform_3, window_bounds = array<i64: 48, 64>}, {pipeline_mode = #tpu.pipeline_mode<synchronous>, transform_indices = @transform_4, window_bounds = array<i64: 2, 48>}, {pipeline_mode = #tpu.pipeline_mode<synchronous>, transform_indices = @transform_5, window_bounds = array<i64: 48, 2>}, {pipeline_mode = #tpu.pipeline_mode<synchronous>, transform_indices = @transform_6, window_bounds = array<i64: 64, 48>}, {pipeline_mode = #tpu.pipeline_mode<synchronous>, transform_indices = @transform_7, window_bounds = array<i64: 80, 64>}, {pipeline_mode = #tpu.pipeline_mode<synchronous>, transform_indices = @transform_8, window_bounds = array<i64: 16, 80>}, {pipeline_mode = #tpu.pipeline_mode<synchronous>, transform_indices = @transform_9, window_bounds = array<i64: 1176, 1>}, {transform_indices = @transform_10, window_bounds = array<i64: 18, 8>}]} {
    %c0 = arith.constant 0 : index
    %c0_0 = arith.constant 0 : index
    %0 = vector.load %arg10[%c0, %c0_0] : memref<1176x1xf32, #tpu.memory_space<vmem>>, vector<1176x1xf32>
    %c0_1 = arith.constant 0 : index
    %c0_2 = arith.constant 0 : index
    %1 = vector.load %arg1[%c0_1, %c0_2] : memref<16x8xf32, #tpu.memory_space<vmem>>, vector<16x8xf32>
    %c0_3 = arith.constant 0 : index
    %c0_4 = arith.constant 0 : index
    %2 = vector.load %arg2[%c0_3, %c0_4] : memref<80x16xf32, #tpu.memory_space<vmem>>, vector<80x16xf32>
    %cst = arith.constant dense<0.000000e+00> : vector<80x8xf32>
    %3 = tpu.matmul %2, %1, %cst {dimension_numbers = #tpu.dot_dimension_numbers<[1], [0], [0], [1], [0, 0, 1, 1], [], []>} : vector<80x16xf32>, vector<16x8xf32>, vector<80x8xf32> -> vector<80x8xf32>
    %4 = vector.extract_strided_slice %0 {offsets = [0, 0], sizes = [80, 1], strides = [1, 1]} : vector<1176x1xf32> to vector<80x1xf32>
    %5 = vector.broadcast %4 : vector<80x1xf32> to vector<80x8xf32>
    %6 = arith.addf %3, %5 : vector<80x8xf32>
    %7 = vector.extract_strided_slice %0 {offsets = [80, 0], sizes = [80, 1], strides = [1, 1]} : vector<1176x1xf32> to vector<80x1xf32>
    %8 = vector.extract_strided_slice %0 {offsets = [160, 0], sizes = [80, 1], strides = [1, 1]} : vector<1176x1xf32> to vector<80x1xf32>
    %cst_5 = arith.constant dense<0.000000e+00> : vector<8xf32>
    %9 = vector.multi_reduction <add>, %6, %cst_5 [0] : vector<80x8xf32> to vector<8xf32>
    %10 = vector.shape_cast %9 : vector<8xf32> to vector<1x8xf32>
    %cst_6 = arith.constant 1.250000e-02 : f32
    %11 = vector.broadcast %cst_6 : f32 to vector<1x8xf32>
    %12 = arith.mulf %10, %11 : vector<1x8xf32>
    %13 = vector.broadcast %12 : vector<1x8xf32> to vector<80x8xf32>
    %14 = arith.subf %6, %13 : vector<80x8xf32>
    %15 = arith.mulf %14, %14 : vector<80x8xf32>
    %cst_7 = arith.constant dense<0.000000e+00> : vector<8xf32>
    %16 = vector.multi_reduction <add>, %15, %cst_7 [0] : vector<80x8xf32> to vector<8xf32>
    %17 = vector.shape_cast %16 : vector<8xf32> to vector<1x8xf32>
    %cst_8 = arith.constant 1.250000e-02 : f32
    %18 = vector.broadcast %cst_8 : f32 to vector<1x8xf32>
    %19 = arith.mulf %17, %18 : vector<1x8xf32>
    %cst_9 = arith.constant 9.99999974E-6 : f32
    %20 = vector.broadcast %cst_9 : f32 to vector<1x8xf32>
    %21 = arith.addf %19, %20 : vector<1x8xf32>
    %22 = math.rsqrt %21 : vector<1x8xf32>
    %23 = vector.broadcast %22 : vector<1x8xf32> to vector<80x8xf32>
    %24 = arith.mulf %14, %23 : vector<80x8xf32>
    %25 = vector.broadcast %7 : vector<80x1xf32> to vector<80x8xf32>
    %26 = arith.mulf %24, %25 : vector<80x8xf32>
    %27 = vector.broadcast %8 : vector<80x1xf32> to vector<80x8xf32>
    %28 = arith.addf %26, %27 : vector<80x8xf32>
    %cst_10 = arith.constant 0.000000e+00 : f32
    %29 = vector.broadcast %cst_10 : f32 to vector<80x8xf32>
    %30 = arith.maximumf %28, %29 : vector<80x8xf32>
    %c0_11 = arith.constant 0 : index
    %c0_12 = arith.constant 0 : index
    %31 = vector.load %arg3[%c0_11, %c0_12] : memref<64x80xf32, #tpu.memory_space<vmem>>, vector<64x80xf32>
    %cst_13 = arith.constant dense<0.000000e+00> : vector<64x8xf32>
    %32 = tpu.matmul %31, %30, %cst_13 {dimension_numbers = #tpu.dot_dimension_numbers<[1], [0], [0], [1], [0, 0, 1, 1], [], []>} : vector<64x80xf32>, vector<80x8xf32>, vector<64x8xf32> -> vector<64x8xf32>
    %33 = vector.extract_strided_slice %0 {offsets = [240, 0], sizes = [64, 1], strides = [1, 1]} : vector<1176x1xf32> to vector<64x1xf32>
    %34 = vector.broadcast %33 : vector<64x1xf32> to vector<64x8xf32>
    %35 = arith.addf %32, %34 : vector<64x8xf32>
    %36 = vector.extract_strided_slice %0 {offsets = [304, 0], sizes = [64, 1], strides = [1, 1]} : vector<1176x1xf32> to vector<64x1xf32>
    %37 = vector.extract_strided_slice %0 {offsets = [368, 0], sizes = [64, 1], strides = [1, 1]} : vector<1176x1xf32> to vector<64x1xf32>
    %cst_14 = arith.constant dense<0.000000e+00> : vector<8xf32>
    %38 = vector.multi_reduction <add>, %35, %cst_14 [0] : vector<64x8xf32> to vector<8xf32>
    %39 = vector.shape_cast %38 : vector<8xf32> to vector<1x8xf32>
    %cst_15 = arith.constant 1.562500e-02 : f32
    %40 = vector.broadcast %cst_15 : f32 to vector<1x8xf32>
    %41 = arith.mulf %39, %40 : vector<1x8xf32>
    %42 = vector.broadcast %41 : vector<1x8xf32> to vector<64x8xf32>
    %43 = arith.subf %35, %42 : vector<64x8xf32>
    %44 = arith.mulf %43, %43 : vector<64x8xf32>
    %cst_16 = arith.constant dense<0.000000e+00> : vector<8xf32>
    %45 = vector.multi_reduction <add>, %44, %cst_16 [0] : vector<64x8xf32> to vector<8xf32>
    %46 = vector.shape_cast %45 : vector<8xf32> to vector<1x8xf32>
    %cst_17 = arith.constant 1.562500e-02 : f32
    %47 = vector.broadcast %cst_17 : f32 to vector<1x8xf32>
    %48 = arith.mulf %46, %47 : vector<1x8xf32>
    %cst_18 = arith.constant 9.99999974E-6 : f32
    %49 = vector.broadcast %cst_18 : f32 to vector<1x8xf32>
    %50 = arith.addf %48, %49 : vector<1x8xf32>
    %51 = math.rsqrt %50 : vector<1x8xf32>
    %52 = vector.broadcast %51 : vector<1x8xf32> to vector<64x8xf32>
    %53 = arith.mulf %43, %52 : vector<64x8xf32>
    %54 = vector.broadcast %36 : vector<64x1xf32> to vector<64x8xf32>
    %55 = arith.mulf %53, %54 : vector<64x8xf32>
    %56 = vector.broadcast %37 : vector<64x1xf32> to vector<64x8xf32>
    %57 = arith.addf %55, %56 : vector<64x8xf32>
    %cst_19 = arith.constant 0.000000e+00 : f32
    %58 = vector.broadcast %cst_19 : f32 to vector<64x8xf32>
    %59 = arith.maximumf %57, %58 : vector<64x8xf32>
    %c0_20 = arith.constant 0 : index
    %c0_21 = arith.constant 0 : index
    %60 = vector.load %arg4[%c0_20, %c0_21] : memref<48x64xf32, #tpu.memory_space<vmem>>, vector<48x64xf32>
    %cst_22 = arith.constant dense<0.000000e+00> : vector<48x8xf32>
    %61 = tpu.matmul %60, %59, %cst_22 {dimension_numbers = #tpu.dot_dimension_numbers<[1], [0], [0], [1], [0, 0, 1, 1], [], []>} : vector<48x64xf32>, vector<64x8xf32>, vector<48x8xf32> -> vector<48x8xf32>
    %62 = vector.extract_strided_slice %0 {offsets = [432, 0], sizes = [48, 1], strides = [1, 1]} : vector<1176x1xf32> to vector<48x1xf32>
    %63 = vector.broadcast %62 : vector<48x1xf32> to vector<48x8xf32>
    %64 = arith.addf %61, %63 : vector<48x8xf32>
    %65 = vector.extract_strided_slice %0 {offsets = [480, 0], sizes = [48, 1], strides = [1, 1]} : vector<1176x1xf32> to vector<48x1xf32>
    %66 = vector.extract_strided_slice %0 {offsets = [528, 0], sizes = [48, 1], strides = [1, 1]} : vector<1176x1xf32> to vector<48x1xf32>
    %cst_23 = arith.constant dense<0.000000e+00> : vector<8xf32>
    %67 = vector.multi_reduction <add>, %64, %cst_23 [0] : vector<48x8xf32> to vector<8xf32>
    %68 = vector.shape_cast %67 : vector<8xf32> to vector<1x8xf32>
    %cst_24 = arith.constant 0.020833334 : f32
    %69 = vector.broadcast %cst_24 : f32 to vector<1x8xf32>
    %70 = arith.mulf %68, %69 : vector<1x8xf32>
    %71 = vector.broadcast %70 : vector<1x8xf32> to vector<48x8xf32>
    %72 = arith.subf %64, %71 : vector<48x8xf32>
    %73 = arith.mulf %72, %72 : vector<48x8xf32>
    %cst_25 = arith.constant dense<0.000000e+00> : vector<8xf32>
    %74 = vector.multi_reduction <add>, %73, %cst_25 [0] : vector<48x8xf32> to vector<8xf32>
    %75 = vector.shape_cast %74 : vector<8xf32> to vector<1x8xf32>
    %cst_26 = arith.constant 0.020833334 : f32
    %76 = vector.broadcast %cst_26 : f32 to vector<1x8xf32>
    %77 = arith.mulf %75, %76 : vector<1x8xf32>
    %cst_27 = arith.constant 9.99999974E-6 : f32
    %78 = vector.broadcast %cst_27 : f32 to vector<1x8xf32>
    %79 = arith.addf %77, %78 : vector<1x8xf32>
    %80 = math.rsqrt %79 : vector<1x8xf32>
    %81 = vector.broadcast %80 : vector<1x8xf32> to vector<48x8xf32>
    %82 = arith.mulf %72, %81 : vector<48x8xf32>
    %83 = vector.broadcast %65 : vector<48x1xf32> to vector<48x8xf32>
    %84 = arith.mulf %82, %83 : vector<48x8xf32>
    %85 = vector.broadcast %66 : vector<48x1xf32> to vector<48x8xf32>
    %86 = arith.addf %84, %85 : vector<48x8xf32>
    %cst_28 = arith.constant 0.000000e+00 : f32
    %87 = vector.broadcast %cst_28 : f32 to vector<48x8xf32>
    %88 = arith.maximumf %86, %87 : vector<48x8xf32>
    %c0_29 = arith.constant 0 : index
    %c0_30 = arith.constant 0 : index
    %89 = vector.load %arg5[%c0_29, %c0_30] : memref<2x48xf32, #tpu.memory_space<vmem>>, vector<2x48xf32>
    %cst_31 = arith.constant dense<0.000000e+00> : vector<2x8xf32>
    %90 = tpu.matmul %89, %88, %cst_31 {dimension_numbers = #tpu.dot_dimension_numbers<[1], [0], [0], [1], [0, 0, 1, 1], [], []>} : vector<2x48xf32>, vector<48x8xf32>, vector<2x8xf32> -> vector<2x8xf32>
    %91 = vector.extract_strided_slice %0 {offsets = [576, 0], sizes = [2, 1], strides = [1, 1]} : vector<1176x1xf32> to vector<2x1xf32>
    %92 = vector.broadcast %91 : vector<2x1xf32> to vector<2x8xf32>
    %93 = arith.addf %90, %92 : vector<2x8xf32>
    %c0_32 = arith.constant 0 : index
    %c0_33 = arith.constant 0 : index
    %94 = vector.load %arg6[%c0_32, %c0_33] : memref<48x2xf32, #tpu.memory_space<vmem>>, vector<48x2xf32>
    %cst_34 = arith.constant dense<0.000000e+00> : vector<48x8xf32>
    %95 = tpu.matmul %94, %93, %cst_34 {dimension_numbers = #tpu.dot_dimension_numbers<[1], [0], [0], [1], [0, 0, 1, 1], [], []>} : vector<48x2xf32>, vector<2x8xf32>, vector<48x8xf32> -> vector<48x8xf32>
    %96 = vector.extract_strided_slice %0 {offsets = [584, 0], sizes = [48, 1], strides = [1, 1]} : vector<1176x1xf32> to vector<48x1xf32>
    %97 = vector.broadcast %96 : vector<48x1xf32> to vector<48x8xf32>
    %98 = arith.addf %95, %97 : vector<48x8xf32>
    %99 = vector.extract_strided_slice %0 {offsets = [632, 0], sizes = [48, 1], strides = [1, 1]} : vector<1176x1xf32> to vector<48x1xf32>
    %100 = vector.extract_strided_slice %0 {offsets = [680, 0], sizes = [48, 1], strides = [1, 1]} : vector<1176x1xf32> to vector<48x1xf32>
    %cst_35 = arith.constant dense<0.000000e+00> : vector<8xf32>
    %101 = vector.multi_reduction <add>, %98, %cst_35 [0] : vector<48x8xf32> to vector<8xf32>
    %102 = vector.shape_cast %101 : vector<8xf32> to vector<1x8xf32>
    %cst_36 = arith.constant 0.020833334 : f32
    %103 = vector.broadcast %cst_36 : f32 to vector<1x8xf32>
    %104 = arith.mulf %102, %103 : vector<1x8xf32>
    %105 = vector.broadcast %104 : vector<1x8xf32> to vector<48x8xf32>
    %106 = arith.subf %98, %105 : vector<48x8xf32>
    %107 = arith.mulf %106, %106 : vector<48x8xf32>
    %cst_37 = arith.constant dense<0.000000e+00> : vector<8xf32>
    %108 = vector.multi_reduction <add>, %107, %cst_37 [0] : vector<48x8xf32> to vector<8xf32>
    %109 = vector.shape_cast %108 : vector<8xf32> to vector<1x8xf32>
    %cst_38 = arith.constant 0.020833334 : f32
    %110 = vector.broadcast %cst_38 : f32 to vector<1x8xf32>
    %111 = arith.mulf %109, %110 : vector<1x8xf32>
    %cst_39 = arith.constant 9.99999974E-6 : f32
    %112 = vector.broadcast %cst_39 : f32 to vector<1x8xf32>
    %113 = arith.addf %111, %112 : vector<1x8xf32>
    %114 = math.rsqrt %113 : vector<1x8xf32>
    %115 = vector.broadcast %114 : vector<1x8xf32> to vector<48x8xf32>
    %116 = arith.mulf %106, %115 : vector<48x8xf32>
    %117 = vector.broadcast %99 : vector<48x1xf32> to vector<48x8xf32>
    %118 = arith.mulf %116, %117 : vector<48x8xf32>
    %119 = vector.broadcast %100 : vector<48x1xf32> to vector<48x8xf32>
    %120 = arith.addf %118, %119 : vector<48x8xf32>
    %cst_40 = arith.constant 0.000000e+00 : f32
    %121 = vector.broadcast %cst_40 : f32 to vector<48x8xf32>
    %122 = arith.maximumf %120, %121 : vector<48x8xf32>
    %c0_41 = arith.constant 0 : index
    %c0_42 = arith.constant 0 : index
    %123 = vector.load %arg7[%c0_41, %c0_42] : memref<64x48xf32, #tpu.memory_space<vmem>>, vector<64x48xf32>
    %cst_43 = arith.constant dense<0.000000e+00> : vector<64x8xf32>
    %124 = tpu.matmul %123, %122, %cst_43 {dimension_numbers = #tpu.dot_dimension_numbers<[1], [0], [0], [1], [0, 0, 1, 1], [], []>} : vector<64x48xf32>, vector<48x8xf32>, vector<64x8xf32> -> vector<64x8xf32>
    %125 = vector.extract_strided_slice %0 {offsets = [728, 0], sizes = [64, 1], strides = [1, 1]} : vector<1176x1xf32> to vector<64x1xf32>
    %126 = vector.broadcast %125 : vector<64x1xf32> to vector<64x8xf32>
    %127 = arith.addf %124, %126 : vector<64x8xf32>
    %128 = vector.extract_strided_slice %0 {offsets = [792, 0], sizes = [64, 1], strides = [1, 1]} : vector<1176x1xf32> to vector<64x1xf32>
    %129 = vector.extract_strided_slice %0 {offsets = [856, 0], sizes = [64, 1], strides = [1, 1]} : vector<1176x1xf32> to vector<64x1xf32>
    %cst_44 = arith.constant dense<0.000000e+00> : vector<8xf32>
    %130 = vector.multi_reduction <add>, %127, %cst_44 [0] : vector<64x8xf32> to vector<8xf32>
    %131 = vector.shape_cast %130 : vector<8xf32> to vector<1x8xf32>
    %cst_45 = arith.constant 1.562500e-02 : f32
    %132 = vector.broadcast %cst_45 : f32 to vector<1x8xf32>
    %133 = arith.mulf %131, %132 : vector<1x8xf32>
    %134 = vector.broadcast %133 : vector<1x8xf32> to vector<64x8xf32>
    %135 = arith.subf %127, %134 : vector<64x8xf32>
    %136 = arith.mulf %135, %135 : vector<64x8xf32>
    %cst_46 = arith.constant dense<0.000000e+00> : vector<8xf32>
    %137 = vector.multi_reduction <add>, %136, %cst_46 [0] : vector<64x8xf32> to vector<8xf32>
    %138 = vector.shape_cast %137 : vector<8xf32> to vector<1x8xf32>
    %cst_47 = arith.constant 1.562500e-02 : f32
    %139 = vector.broadcast %cst_47 : f32 to vector<1x8xf32>
    %140 = arith.mulf %138, %139 : vector<1x8xf32>
    %cst_48 = arith.constant 9.99999974E-6 : f32
    %141 = vector.broadcast %cst_48 : f32 to vector<1x8xf32>
    %142 = arith.addf %140, %141 : vector<1x8xf32>
    %143 = math.rsqrt %142 : vector<1x8xf32>
    %144 = vector.broadcast %143 : vector<1x8xf32> to vector<64x8xf32>
    %145 = arith.mulf %135, %144 : vector<64x8xf32>
    %146 = vector.broadcast %128 : vector<64x1xf32> to vector<64x8xf32>
    %147 = arith.mulf %145, %146 : vector<64x8xf32>
    %148 = vector.broadcast %129 : vector<64x1xf32> to vector<64x8xf32>
    %149 = arith.addf %147, %148 : vector<64x8xf32>
    %cst_49 = arith.constant 0.000000e+00 : f32
    %150 = vector.broadcast %cst_49 : f32 to vector<64x8xf32>
    %151 = arith.maximumf %149, %150 : vector<64x8xf32>
    %c0_50 = arith.constant 0 : index
    %c0_51 = arith.constant 0 : index
    %152 = vector.load %arg8[%c0_50, %c0_51] : memref<80x64xf32, #tpu.memory_space<vmem>>, vector<80x64xf32>
    %cst_52 = arith.constant dense<0.000000e+00> : vector<80x8xf32>
    %153 = tpu.matmul %152, %151, %cst_52 {dimension_numbers = #tpu.dot_dimension_numbers<[1], [0], [0], [1], [0, 0, 1, 1], [], []>} : vector<80x64xf32>, vector<64x8xf32>, vector<80x8xf32> -> vector<80x8xf32>
    %154 = vector.extract_strided_slice %0 {offsets = [920, 0], sizes = [80, 1], strides = [1, 1]} : vector<1176x1xf32> to vector<80x1xf32>
    %155 = vector.broadcast %154 : vector<80x1xf32> to vector<80x8xf32>
    %156 = arith.addf %153, %155 : vector<80x8xf32>
    %157 = vector.extract_strided_slice %0 {offsets = [1000, 0], sizes = [80, 1], strides = [1, 1]} : vector<1176x1xf32> to vector<80x1xf32>
    %158 = vector.extract_strided_slice %0 {offsets = [1080, 0], sizes = [80, 1], strides = [1, 1]} : vector<1176x1xf32> to vector<80x1xf32>
    %cst_53 = arith.constant dense<0.000000e+00> : vector<8xf32>
    %159 = vector.multi_reduction <add>, %156, %cst_53 [0] : vector<80x8xf32> to vector<8xf32>
    %160 = vector.shape_cast %159 : vector<8xf32> to vector<1x8xf32>
    %cst_54 = arith.constant 1.250000e-02 : f32
    %161 = vector.broadcast %cst_54 : f32 to vector<1x8xf32>
    %162 = arith.mulf %160, %161 : vector<1x8xf32>
    %163 = vector.broadcast %162 : vector<1x8xf32> to vector<80x8xf32>
    %164 = arith.subf %156, %163 : vector<80x8xf32>
    %165 = arith.mulf %164, %164 : vector<80x8xf32>
    %cst_55 = arith.constant dense<0.000000e+00> : vector<8xf32>
    %166 = vector.multi_reduction <add>, %165, %cst_55 [0] : vector<80x8xf32> to vector<8xf32>
    %167 = vector.shape_cast %166 : vector<8xf32> to vector<1x8xf32>
    %cst_56 = arith.constant 1.250000e-02 : f32
    %168 = vector.broadcast %cst_56 : f32 to vector<1x8xf32>
    %169 = arith.mulf %167, %168 : vector<1x8xf32>
    %cst_57 = arith.constant 9.99999974E-6 : f32
    %170 = vector.broadcast %cst_57 : f32 to vector<1x8xf32>
    %171 = arith.addf %169, %170 : vector<1x8xf32>
    %172 = math.rsqrt %171 : vector<1x8xf32>
    %173 = vector.broadcast %172 : vector<1x8xf32> to vector<80x8xf32>
    %174 = arith.mulf %164, %173 : vector<80x8xf32>
    %175 = vector.broadcast %157 : vector<80x1xf32> to vector<80x8xf32>
    %176 = arith.mulf %174, %175 : vector<80x8xf32>
    %177 = vector.broadcast %158 : vector<80x1xf32> to vector<80x8xf32>
    %178 = arith.addf %176, %177 : vector<80x8xf32>
    %cst_58 = arith.constant 0.000000e+00 : f32
    %179 = vector.broadcast %cst_58 : f32 to vector<80x8xf32>
    %180 = arith.maximumf %178, %179 : vector<80x8xf32>
    %c0_59 = arith.constant 0 : index
    %c0_60 = arith.constant 0 : index
    %181 = vector.load %arg9[%c0_59, %c0_60] : memref<16x80xf32, #tpu.memory_space<vmem>>, vector<16x80xf32>
    %cst_61 = arith.constant dense<0.000000e+00> : vector<16x8xf32>
    %182 = tpu.matmul %181, %180, %cst_61 {dimension_numbers = #tpu.dot_dimension_numbers<[1], [0], [0], [1], [0, 0, 1, 1], [], []>} : vector<16x80xf32>, vector<80x8xf32>, vector<16x8xf32> -> vector<16x8xf32>
    %183 = vector.extract_strided_slice %0 {offsets = [1160, 0], sizes = [16, 1], strides = [1, 1]} : vector<1176x1xf32> to vector<16x1xf32>
    %184 = vector.broadcast %183 : vector<16x1xf32> to vector<16x8xf32>
    %185 = arith.addf %182, %184 : vector<16x8xf32>
    %cst_62 = arith.constant dense<0xFF800000> : vector<8xf32>
    %186 = vector.multi_reduction <maximumf>, %185, %cst_62 [0] : vector<16x8xf32> to vector<8xf32>
    %187 = vector.shape_cast %186 : vector<8xf32> to vector<1x8xf32>
    %188 = vector.broadcast %187 : vector<1x8xf32> to vector<16x8xf32>
    %189 = arith.subf %185, %188 : vector<16x8xf32>
    %190 = math.exp %189 : vector<16x8xf32>
    %cst_63 = arith.constant dense<0.000000e+00> : vector<8xf32>
    %191 = vector.multi_reduction <add>, %190, %cst_63 [0] : vector<16x8xf32> to vector<8xf32>
    %192 = vector.shape_cast %191 : vector<8xf32> to vector<1x8xf32>
    %cst_64 = arith.constant 1.000000e+00 : f32
    %193 = vector.broadcast %cst_64 : f32 to vector<1x8xf32>
    %194 = arith.divf %193, %192 : vector<1x8xf32>
    %195 = vector.broadcast %194 : vector<1x8xf32> to vector<16x8xf32>
    %196 = arith.mulf %190, %195 : vector<16x8xf32>
    %c0_65 = arith.constant 0 : index
    %c0_66 = arith.constant 0 : index
    %197 = vector.load %arg11[%c0_65, %c0_66] : memref<18x8xf32, #tpu.memory_space<vmem>>, vector<16x8xf32>
    tpu.vector_store %arg11[%c0_65, %c0_66], %196 {strides = array<i32>} : memref<18x8xf32, #tpu.memory_space<vmem>>, vector<16x8xf32>,
    %c16 = arith.constant 16 : index
    %c0_67 = arith.constant 0 : index
    %198 = vector.load %arg11[%c16, %c0_67] : memref<18x8xf32, #tpu.memory_space<vmem>>, vector<2x8xf32>
    tpu.vector_store %arg11[%c16, %c0_67], %93 {strides = array<i32>} : memref<18x8xf32, #tpu.memory_space<vmem>>, vector<2x8xf32>,
    return
  }
  func.func @transform_0(%arg0: i32) -> (i32, i32) {
    %c0_i32 = arith.constant 0 : i32
    %c0_i32_0 = arith.constant 0 : i32
    return %c0_i32, %arg0 : i32, i32
  }
  func.func @transform_1(%arg0: i32) -> (i32, i32) {
    %c0_i32 = arith.constant 0 : i32
    %c0_i32_0 = arith.constant 0 : i32
    %c0_i32_1 = arith.constant 0 : i32
    return %c0_i32, %c0_i32_0 : i32, i32
  }
  func.func @transform_2(%arg0: i32) -> (i32, i32) {
    %c0_i32 = arith.constant 0 : i32
    %c0_i32_0 = arith.constant 0 : i32
    %c0_i32_1 = arith.constant 0 : i32
    return %c0_i32, %c0_i32_0 : i32, i32
  }
  func.func @transform_3(%arg0: i32) -> (i32, i32) {
    %c0_i32 = arith.constant 0 : i32
    %c0_i32_0 = arith.constant 0 : i32
    %c0_i32_1 = arith.constant 0 : i32
    return %c0_i32, %c0_i32_0 : i32, i32
  }
  func.func @transform_4(%arg0: i32) -> (i32, i32) {
    %c0_i32 = arith.constant 0 : i32
    %c0_i32_0 = arith.constant 0 : i32
    %c0_i32_1 = arith.constant 0 : i32
    return %c0_i32, %c0_i32_0 : i32, i32
  }
  func.func @transform_5(%arg0: i32) -> (i32, i32) {
    %c0_i32 = arith.constant 0 : i32
    %c0_i32_0 = arith.constant 0 : i32
    %c0_i32_1 = arith.constant 0 : i32
    return %c0_i32, %c0_i32_0 : i32, i32
  }
  func.func @transform_6(%arg0: i32) -> (i32, i32) {
    %c0_i32 = arith.constant 0 : i32
    %c0_i32_0 = arith.constant 0 : i32
    %c0_i32_1 = arith.constant 0 : i32
    return %c0_i32, %c0_i32_0 : i32, i32
  }
  func.func @transform_7(%arg0: i32) -> (i32, i32) {
    %c0_i32 = arith.constant 0 : i32
    %c0_i32_0 = arith.constant 0 : i32
    %c0_i32_1 = arith.constant 0 : i32
    return %c0_i32, %c0_i32_0 : i32, i32
  }
  func.func @transform_8(%arg0: i32) -> (i32, i32) {
    %c0_i32 = arith.constant 0 : i32
    %c0_i32_0 = arith.constant 0 : i32
    %c0_i32_1 = arith.constant 0 : i32
    return %c0_i32, %c0_i32_0 : i32, i32
  }
  func.func @transform_9(%arg0: i32) -> (i32, i32) {
    %c0_i32 = arith.constant 0 : i32
    %c0_i32_0 = arith.constant 0 : i32
    %c0_i32_1 = arith.constant 0 : i32
    return %c0_i32, %c0_i32_0 : i32, i32
  }
  func.func @transform_10(%arg0: i32) -> (i32, i32) {
    %c0_i32 = arith.constant 0 : i32
    %c0_i32_0 = arith.constant 0 : i32
    return %c0_i32, %arg0 : i32, i32
  }
}

</mosaic_0001>

<llo_original>
// kernel: wae_forward.1
$region0: #{wae_forward.1}
  #allocation0 [shape = 'u32[]', space=smem, size = 0x4, offset = 0x4, fixed_abs, tag = 'smem constant byte address 0x4 - core index']
  #allocation1 [shape = 'u32[72,128]{1,0:T(1,128)}', space=vmem, size = 0x9000, scoped, tag = 'internal scratch']
  %s0 = inlined_call_operand.vmem [shape: f32[16,8], index: 0, kind: input, shape index: {}]
  %s1 = inlined_call_operand.vmem [shape: f32[80,16], index: 1, kind: input, shape index: {}]
  %s2 = inlined_call_operand.vmem [shape: f32[64,80], index: 2, kind: input, shape index: {}]
  %s3 = inlined_call_operand.vmem [shape: f32[48,64], index: 3, kind: input, shape index: {}]
  %s4 = inlined_call_operand.vmem [shape: f32[2,48], index: 4, kind: input, shape index: {}]
  %s5 = inlined_call_operand.vmem [shape: f32[48,2], index: 5, kind: input, shape index: {}]
  %s6 = inlined_call_operand.vmem [shape: f32[64,48], index: 6, kind: input, shape index: {}]
  %s7 = inlined_call_operand.vmem [shape: f32[80,64], index: 7, kind: input, shape index: {}]
  %s8 = inlined_call_operand.vmem [shape: f32[16,80], index: 8, kind: input, shape index: {}]
  %s9 = inlined_call_operand.vmem [shape: f32[1176,1], index: 9, kind: input, shape index: {}]
  %s10 = inlined_call_operand.vmem [shape: f32[18,8], index: 10, kind: output, shape index: {}]
  %s11 = sld [smem:[#allocation0]]
  $region50: #{wae_forward.1} parent=0
    _
  %s13 = ssub.s32 1, %s11
  %s14 = scalar_select 0, %s13, %s11
  // Predicated region
  $region2: #{wae_forward.1} parent=0 // pred_check
    _
  $region3: #{wae_forward.1} parent=0 // pred_check_branch
    %16 = sbr.rel (0) target = $region5
  $region4: #{wae_forward.1} parent=0 // pred_region
    _
  $region5: #{wae_forward.1} parent=0 // pred_fallthru
    _
  // Predicated region
  $region6: #{wae_forward.1} parent=0 // pred_check
    _
  $region7: #{wae_forward.1} parent=0 // pred_check_branch
    %18 = sbr.rel (0) target = $region9
  $region8: #{wae_forward.1} parent=0 // pred_region
    _
  $region9: #{wae_forward.1} parent=0 // pred_fallthru
    _
  // Predicated region
  $region10: #{wae_forward.1} parent=0 // pred_check
    _
  $region11: #{wae_forward.1} parent=0 // pred_check_branch
    %20 = sbr.rel (0) target = $region13
  $region12: #{wae_forward.1} parent=0 // pred_region
    _
  $region13: #{wae_forward.1} parent=0 // pred_fallthru
    _
  // Predicated region
  $region14: #{wae_forward.1} parent=0 // pred_check
    _
  $region15: #{wae_forward.1} parent=0 // pred_check_branch
    %22 = sbr.rel (0) target = $region17
  $region16: #{wae_forward.1} parent=0 // pred_region
    _
  $region17: #{wae_forward.1} parent=0 // pred_fallthru
    _
  // Predicated region
  $region18: #{wae_forward.1} parent=0 // pred_check
    _
  $region19: #{wae_forward.1} parent=0 // pred_check_branch
    %24 = sbr.rel (0) target = $region21
  $region20: #{wae_forward.1} parent=0 // pred_region
    _
  $region21: #{wae_forward.1} parent=0 // pred_fallthru
    _
  // Predicated region
  $region22: #{wae_forward.1} parent=0 // pred_check
    _
  $region23: #{wae_forward.1} parent=0 // pred_check_branch
    %26 = sbr.rel (0) target = $region25
  $region24: #{wae_forward.1} parent=0 // pred_region
    _
  $region25: #{wae_forward.1} parent=0 // pred_fallthru
    _
  // Predicated region
  $region26: #{wae_forward.1} parent=0 // pred_check
    _
  $region27: #{wae_forward.1} parent=0 // pred_check_branch
    %28 = sbr.rel (0) target = $region29
  $region28: #{wae_forward.1} parent=0 // pred_region
    _
  $region29: #{wae_forward.1} parent=0 // pred_fallthru
    _
  // Predicated region
  $region30: #{wae_forward.1} parent=0 // pred_check
    _
  $region31: #{wae_forward.1} parent=0 // pred_check_branch
    %30 = sbr.rel (0) target = $region33
  $region32: #{wae_forward.1} parent=0 // pred_region
    _
  $region33: #{wae_forward.1} parent=0 // pred_fallthru
    _
  // Predicated region
  $region34: #{wae_forward.1} parent=0 // pred_check
    _
  $region35: #{wae_forward.1} parent=0 // pred_check_branch
    %32 = sbr.rel (0) target = $region37
  $region36: #{wae_forward.1} parent=0 // pred_region
    _
  $region37: #{wae_forward.1} parent=0 // pred_fallthru
    _
  // Predicated region
  $region38: #{wae_forward.1} parent=0 // pred_check
    _
  $region39: #{wae_forward.1} parent=0 // pred_check_branch
    %34 = sbr.rel (0) target = $region41
  $region40: #{wae_forward.1} parent=0 // pred_region
    _
  $region41: #{wae_forward.1} parent=0 // pred_fallthru
    _
  %v35 = vld [vmem:[%s9] sm:$0xff]
  %v36 = vld [vmem:[%s9 + $0x8] sm:$0xff]
  %v37 = vld [vmem:[%s9 + $0x10] sm:$0xff]
  %v38 = vld [vmem:[%s9 + $0x18] sm:$0xff]
  %v39 = vld [vmem:[%s9 + $0x20] sm:$0xff]
  %v40 = vld [vmem:[%s9 + $0x28] sm:$0xff]
  %v41 = vld [vmem:[%s9 + $0x30] sm:$0xff]
  %v42 = vld [vmem:[%s9 + $0x38] sm:$0xff]
  %v43 = vld [vmem:[%s9 + $0x40] sm:$0xff]
  %v44 = vld [vmem:[%s9 + $0x48] sm:$0xff]
  %v45 = vld [vmem:[%s9 + $0x50] sm:$0xff]
  %v46 = vld [vmem:[%s9 + $0x58] sm:$0xff]
  %v47 = vld [vmem:[%s9 + $0x60] sm:$0xff]
  %v48 = vld [vmem:[%s9 + $0x68] sm:$0xff]
  %v49 = vld [vmem:[%s9 + $0x70] sm:$0xff]
  %v50 = vld [vmem:[%s9 + $0x78] sm:$0xff]
  %v51 = vld [vmem:[%s9 + $0x80] sm:$0xff]
  %v52 = vld [vmem:[%s9 + $0x88] sm:$0xff]
  %v53 = vld [vmem:[%s9 + $0x90] sm:$0xff]
  %v54 = vld [vmem:[%s9 + $0x98] sm:$0xff]
  %v55 = vld [vmem:[%s9 + $0xa0] sm:$0xff]
  %v56 = vld [vmem:[%s9 + $0xa8] sm:$0xff]
  %v57 = vld [vmem:[%s9 + $0xb0] sm:$0xff]
  %v58 = vld [vmem:[%s9 + $0xb8] sm:$0xff]
  %v59 = vld [vmem:[%s9 + $0xc0] sm:$0xff]
  %v60 = vld [vmem:[%s9 + $0xc8] sm:$0xff]
  %v61 = vld [vmem:[%s9 + $0xd0] sm:$0xff]
  %v62 = vld [vmem:[%s9 + $0xd8] sm:$0xff]
  %v63 = vld [vmem:[%s9 + $0xe0] sm:$0xff]
  %v64 = vld [vmem:[%s9 + $0xe8] sm:$0xff]
  %v65 = vld [vmem:[%s9 + $0xf0] sm:$0xff]
  %v66 = vld [vmem:[%s9 + $0xf8] sm:$0xff]
  %v67 = vld [vmem:[%s9 + $0x100] sm:$0xff]
  %v68 = vld [vmem:[%s9 + $0x108] sm:$0xff]
  %v69 = vld [vmem:[%s9 + $0x110] sm:$0xff]
  %v70 = vld [vmem:[%s9 + $0x118] sm:$0xff]
  %v71 = vld [vmem:[%s9 + $0x120] sm:$0xff]
  %v72 = vld [vmem:[%s9 + $0x128] sm:$0xff]
  %v73 = vld [vmem:[%s9 + $0x130] sm:$0xff]
  %v74 = vld [vmem:[%s9 + $0x138] sm:$0xff]
  %v75 = vld [vmem:[%s9 + $0x140] sm:$0xff]
  %v76 = vld [vmem:[%s9 + $0x148] sm:$0xff]
  %v77 = vld [vmem:[%s9 + $0x150] sm:$0xff]
  %v78 = vld [vmem:[%s9 + $0x158] sm:$0xff]
  %v79 = vld [vmem:[%s9 + $0x160] sm:$0xff]
  %v80 = vld [vmem:[%s9 + $0x168] sm:$0xff]
  %v81 = vld [vmem:[%s9 + $0x170] sm:$0xff]
  %v82 = vld [vmem:[%s9 + $0x178] sm:$0xff]
  %v83 = vld [vmem:[%s9 + $0x180] sm:$0xff]
  %v84 = vld [vmem:[%s9 + $0x188] sm:$0xff]
  %v85 = vld [vmem:[%s9 + $0x190] sm:$0xff]
  %v86 = vld [vmem:[%s9 + $0x198] sm:$0xff]
  %v87 = vld [vmem:[%s9 + $0x1a0] sm:$0xff]
  %v88 = vld [vmem:[%s9 + $0x1a8] sm:$0xff]
  %v89 = vld [vmem:[%s9 + $0x1b0] sm:$0xff]
  %v90 = vld [vmem:[%s9 + $0x1b8] sm:$0xff]
  %v91 = vld [vmem:[%s9 + $0x1c0] sm:$0xff]
  %v92 = vld [vmem:[%s9 + $0x1c8] sm:$0xff]
  %v93 = vld [vmem:[%s9 + $0x1d0] sm:$0xff]
  %v94 = vld [vmem:[%s9 + $0x1d8] sm:$0xff]
  %v95 = vld [vmem:[%s9 + $0x1e0] sm:$0xff]
  %v96 = vld [vmem:[%s9 + $0x1e8] sm:$0xff]
  %v97 = vld [vmem:[%s9 + $0x1f0] sm:$0xff]
  %v98 = vld [vmem:[%s9 + $0x1f8] sm:$0xff]
  %v99 = vld [vmem:[%s9 + $0x200] sm:$0xff]
  %v100 = vld [vmem:[%s9 + $0x208] sm:$0xff]
  %v101 = vld [vmem:[%s9 + $0x210] sm:$0xff]
  %v102 = vld [vmem:[%s9 + $0x218] sm:$0xff]
  %v103 = vld [vmem:[%s9 + $0x220] sm:$0xff]
  %v104 = vld [vmem:[%s9 + $0x228] sm:$0xff]
  %v105 = vld [vmem:[%s9 + $0x230] sm:$0xff]
  %v106 = vld [vmem:[%s9 + $0x238] sm:$0xff]
  %v107 = vld [vmem:[%s9 + $0x240] sm:$0xff]
  %v108 = vld [vmem:[%s9 + $0x248] sm:$0xff]
  %v109 = vld [vmem:[%s9 + $0x250] sm:$0xff]
  %v110 = vld [vmem:[%s9 + $0x258] sm:$0xff]
  %v111 = vld [vmem:[%s9 + $0x260] sm:$0xff]
  %v112 = vld [vmem:[%s9 + $0x268] sm:$0xff]
  %v113 = vld [vmem:[%s9 + $0x270] sm:$0xff]
  %v114 = vld [vmem:[%s9 + $0x278] sm:$0xff]
  %v115 = vld [vmem:[%s9 + $0x280] sm:$0xff]
  %v116 = vld [vmem:[%s9 + $0x288] sm:$0xff]
  %v117 = vld [vmem:[%s9 + $0x290] sm:$0xff]
  %v118 = vld [vmem:[%s9 + $0x298] sm:$0xff]
  %v119 = vld [vmem:[%s9 + $0x2a0] sm:$0xff]
  %v120 = vld [vmem:[%s9 + $0x2a8] sm:$0xff]
  %v121 = vld [vmem:[%s9 + $0x2b0] sm:$0xff]
  %v122 = vld [vmem:[%s9 + $0x2b8] sm:$0xff]
  %v123 = vld [vmem:[%s9 + $0x2c0] sm:$0xff]
  %v124 = vld [vmem:[%s9 + $0x2c8] sm:$0xff]
  %v125 = vld [vmem:[%s9 + $0x2d0] sm:$0xff]
  %v126 = vld [vmem:[%s9 + $0x2d8] sm:$0xff]
  %v127 = vld [vmem:[%s9 + $0x2e0] sm:$0xff]
  %v128 = vld [vmem:[%s9 + $0x2e8] sm:$0xff]
  %v129 = vld [vmem:[%s9 + $0x2f0] sm:$0xff]
  %v130 = vld [vmem:[%s9 + $0x2f8] sm:$0xff]
  %v131 = vld [vmem:[%s9 + $0x300] sm:$0xff]
  %v132 = vld [vmem:[%s9 + $0x308] sm:$0xff]
  %v133 = vld [vmem:[%s9 + $0x310] sm:$0xff]
  %v134 = vld [vmem:[%s9 + $0x318] sm:$0xff]
  %v135 = vld [vmem:[%s9 + $0x320] sm:$0xff]
  %v136 = vld [vmem:[%s9 + $0x328] sm:$0xff]
  %v137 = vld [vmem:[%s9 + $0x330] sm:$0xff]
  %v138 = vld [vmem:[%s9 + $0x338] sm:$0xff]
  %v139 = vld [vmem:[%s9 + $0x340] sm:$0xff]
  %v140 = vld [vmem:[%s9 + $0x348] sm:$0xff]
  %v141 = vld [vmem:[%s9 + $0x350] sm:$0xff]
  %v142 = vld [vmem:[%s9 + $0x358] sm:$0xff]
  %v143 = vld [vmem:[%s9 + $0x360] sm:$0xff]
  %v144 = vld [vmem:[%s9 + $0x368] sm:$0xff]
  %v145 = vld [vmem:[%s9 + $0x370] sm:$0xff]
  %v146 = vld [vmem:[%s9 + $0x378] sm:$0xff]
  %v147 = vld [vmem:[%s9 + $0x380] sm:$0xff]
  %v148 = vld [vmem:[%s9 + $0x388] sm:$0xff]
  %v149 = vld [vmem:[%s9 + $0x390] sm:$0xff]
  %v150 = vld [vmem:[%s9 + $0x398] sm:$0xff]
  %v151 = vld [vmem:[%s9 + $0x3a0] sm:$0xff]
  %v152 = vld [vmem:[%s9 + $0x3a8] sm:$0xff]
  %v153 = vld [vmem:[%s9 + $0x3b0] sm:$0xff]
  %v154 = vld [vmem:[%s9 + $0x3b8] sm:$0xff]
  %v155 = vld [vmem:[%s9 + $0x3c0] sm:$0xff]
  %v156 = vld [vmem:[%s9 + $0x3c8] sm:$0xff]
  %v157 = vld [vmem:[%s9 + $0x3d0] sm:$0xff]
  %v158 = vld [vmem:[%s9 + $0x3d8] sm:$0xff]
  %v159 = vld [vmem:[%s9 + $0x3e0] sm:$0xff]
  %v160 = vld [vmem:[%s9 + $0x3e8] sm:$0xff]
  %v161 = vld [vmem:[%s9 + $0x3f0] sm:$0xff]
  %v162 = vld [vmem:[%s9 + $0x3f8] sm:$0xff]
  %v163 = vld [vmem:[%s9 + $0x400] sm:$0xff]
  %v164 = vld [vmem:[%s9 + $0x408] sm:$0xff]
  %v165 = vld [vmem:[%s9 + $0x410] sm:$0xff]
  %v166 = vld [vmem:[%s9 + $0x418] sm:$0xff]
  %v167 = vld [vmem:[%s9 + $0x420] sm:$0xff]
  %v168 = vld [vmem:[%s9 + $0x428] sm:$0xff]
  %v169 = vld [vmem:[%s9 + $0x430] sm:$0xff]
  %v170 = vld [vmem:[%s9 + $0x438] sm:$0xff]
  %v171 = vld [vmem:[%s9 + $0x440] sm:$0xff]
  %v172 = vld [vmem:[%s9 + $0x448] sm:$0xff]
  %v173 = vld [vmem:[%s9 + $0x450] sm:$0xff]
  %v174 = vld [vmem:[%s9 + $0x458] sm:$0xff]
  %v175 = vld [vmem:[%s9 + $0x460] sm:$0xff]
  %v176 = vld [vmem:[%s9 + $0x468] sm:$0xff]
  %v177 = vld [vmem:[%s9 + $0x470] sm:$0xff]
  %v178 = vld [vmem:[%s9 + $0x478] sm:$0xff]
  %v179 = vld [vmem:[%s9 + $0x480] sm:$0xff]
  %v180 = vld [vmem:[%s9 + $0x488] sm:$0xff]
  %v181 = vld [vmem:[%s9 + $0x490] sm:$0xff]
  %v182 = vld [vmem:[%s0] sm:$0xff]
  %v183 = vld [vmem:[%s0 + $0x8] sm:$0xff]
  %v184 = vld [vmem:[%s1] sm:$0xff]
  %v185 = vld [vmem:[%s1 + $0x8] sm:$0xff]
  %v186 = vld [vmem:[%s1 + $0x10] sm:$0xff]
  %v187 = vld [vmem:[%s1 + $0x18] sm:$0xff]
  %v188 = vld [vmem:[%s1 + $0x20] sm:$0xff]
  %v189 = vld [vmem:[%s1 + $0x28] sm:$0xff]
  %v190 = vld [vmem:[%s1 + $0x30] sm:$0xff]
  %v191 = vld [vmem:[%s1 + $0x38] sm:$0xff]
  %v192 = vld [vmem:[%s1 + $0x40] sm:$0xff]
  %v193 = vld [vmem:[%s1 + $0x48] sm:$0xff]
  %195 = vset.pattern.permute.xlu0 0
  %196 = vperm.xlu0 %195, %v35
  %v197 = vpop.permute.xlu0 %196
  %200 = vset.pattern.permute.xlu0 0
  %201 = vperm.xlu0 %200, %v36
  %v202 = vpop.permute.xlu0 %201
  %205 = vset.pattern.permute.xlu0 0
  %206 = vperm.xlu0 %205, %v37
  %v207 = vpop.permute.xlu0 %206
  %210 = vset.pattern.permute.xlu0 0
  %211 = vperm.xlu0 %210, %v38
  %v212 = vpop.permute.xlu0 %211
  %215 = vset.pattern.permute.xlu0 0
  %216 = vperm.xlu0 %215, %v39
  %v217 = vpop.permute.xlu0 %216
  %220 = vset.pattern.permute.xlu0 0
  %221 = vperm.xlu0 %220, %v40
  %v222 = vpop.permute.xlu0 %221
  %225 = vset.pattern.permute.xlu0 0
  %226 = vperm.xlu0 %225, %v41
  %v227 = vpop.permute.xlu0 %226
  %230 = vset.pattern.permute.xlu0 0
  %231 = vperm.xlu0 %230, %v42
  %v232 = vpop.permute.xlu0 %231
  %235 = vset.pattern.permute.xlu0 0
  %236 = vperm.xlu0 %235, %v43
  %v237 = vpop.permute.xlu0 %236
  %240 = vset.pattern.permute.xlu0 0
  %241 = vperm.xlu0 %240, %v44
  %v242 = vpop.permute.xlu0 %241
  %vm244 = vcmask 130048
  %v246 = vsel %vm244, %v184, 0
  %v249 = vsel %vm244, %v185, 0
  %v252 = vsel %vm244, %v186, 0
  %v255 = vsel %vm244, %v187, 0
  %v258 = vsel %vm244, %v188, 0
  %v261 = vsel %vm244, %v189, 0
  %v264 = vsel %vm244, %v190, 0
  %v267 = vsel %vm244, %v191, 0
  %v270 = vsel %vm244, %v192, 0
  %v273 = vsel %vm244, %v193, 0
  %275 = vmatpush.msra.mxu0 0.0
  %276 = vmatpush.msra.mxu0 0.0
  %277 = vmatpush.msra.mxu0 0.0
  %278 = vmatpush.msra.mxu0 0.0
  %279 = vmatpush.msra.mxu0 0.0
  %280 = vmatpush.msra.mxu0 0.0
  %281 = vmatpush.msra.mxu0 0.0
  %282 = vmatpush.msra.mxu0 0.0
  %283 = vmatpush.msra.mxu0 0.0
  %284 = vmatpush.msra.mxu0 0.0
  %285 = vmatpush.msra.mxu0 0.0
  %286 = vmatpush.msra.mxu0 0.0
  %287 = vmatpush.msra.mxu0 0.0
  %288 = vmatpush.msra.mxu0 0.0
  %289 = vmatpush.msra.mxu0 %v183
  %290 = vmatpush.msra.mxu0 %v182
  %291 = vmatmul.f32.gmra.mxu0 %v246
  %v292 = vpop.f32.mrf.mxu0
  %v293 = vadd.f32 %v197, %v292
  %294 = vmatmul.f32.gmra.mxu0 %v249
  %v295 = vpop.f32.mrf.mxu0
  %v296 = vadd.f32 %v202, %v295
  %297 = vmatmul.f32.gmra.mxu0 %v252
  %v298 = vpop.f32.mrf.mxu0
  %v299 = vadd.f32 %v207, %v298
  %300 = vmatmul.f32.gmra.mxu0 %v255
  %v301 = vpop.f32.mrf.mxu0
  %v302 = vadd.f32 %v212, %v301
  %303 = vmatmul.f32.gmra.mxu0 %v258
  %v304 = vpop.f32.mrf.mxu0
  %v305 = vadd.f32 %v217, %v304
  %306 = vmatmul.f32.gmra.mxu0 %v261
  %v307 = vpop.f32.mrf.mxu0
  %v308 = vadd.f32 %v222, %v307
  %309 = vmatmul.f32.gmra.mxu0 %v264
  %v310 = vpop.f32.mrf.mxu0
  %v311 = vadd.f32 %v227, %v310
  %312 = vmatmul.f32.gmra.mxu0 %v267
  %v313 = vpop.f32.mrf.mxu0
  %v314 = vadd.f32 %v232, %v313
  %315 = vmatmul.f32.gmra.mxu0 %v270
  %v316 = vpop.f32.mrf.mxu0
  %v317 = vadd.f32 %v237, %v316
  %318 = vmatmul.f32.gmra.mxu0 %v273
  %v319 = vpop.f32.mrf.mxu0
  %v320 = vadd.f32 %v242, %v319
  %321 = vdwg.mxu0
  %vm322 = vcmask 64512
  %v323 = vsel %vm322, %v293, 0.0
  %v324 = vsel %vm322, %v296, 0.0
  %v325 = vadd.f32 %v323, %v324
  %v326 = vsel %vm322, %v299, 0.0
  %v327 = vadd.f32 %v325, %v326
  %v328 = vsel %vm322, %v302, 0.0
  %v329 = vadd.f32 %v327, %v328
  %v330 = vsel %vm322, %v305, 0.0
  %v331 = vadd.f32 %v329, %v330
  %v332 = vsel %vm322, %v308, 0.0
  %v333 = vadd.f32 %v331, %v332
  %v334 = vsel %vm322, %v311, 0.0
  %v335 = vadd.f32 %v333, %v334
  %v336 = vsel %vm322, %v314, 0.0
  %v337 = vadd.f32 %v335, %v336
  %v338 = vsel %vm322, %v317, 0.0
  %v339 = vadd.f32 %v337, %v338
  %v340 = vsel %vm322, %v320, 0.0
  %v341 = vadd.f32 %v339, %v340
  %v342 = vrot.slane %v341, 4
  %v343 = vadd.f32 %v341, %v342
  %v344 = vrot.slane %v343, 2
  %v345 = vadd.f32 %v343, %v344
  %v346 = vrot.slane %v345, 1
  %v347 = vadd.f32 %v345, %v346
  %v348 = vmul.f32 %v347, 0.0125
  %v349 = vsub.f32 %v293, %v348
  %v350 = vsub.f32 %v296, %v348
  %v351 = vsub.f32 %v299, %v348
  %v352 = vsub.f32 %v302, %v348
  %v353 = vsub.f32 %v305, %v348
  %v354 = vsub.f32 %v308, %v348
  %v355 = vsub.f32 %v311, %v348
  %v356 = vsub.f32 %v314, %v348
  %v357 = vsub.f32 %v317, %v348
  %v358 = vsub.f32 %v320, %v348
  %v359 = vmul.f32 %v349, %v349
  %v360 = vmul.f32 %v350, %v350
  %v361 = vmul.f32 %v351, %v351
  %v362 = vmul.f32 %v352, %v352
  %v363 = vmul.f32 %v353, %v353
  %v364 = vmul.f32 %v354, %v354
  %v365 = vmul.f32 %v355, %v355
  %v366 = vmul.f32 %v356, %v356
  %v367 = vmul.f32 %v357, %v357
  %v368 = vmul.f32 %v358, %v358
  %v369 = vsel %vm322, %v359, 0.0
  %v370 = vsel %vm322, %v360, 0.0
  %v371 = vadd.f32 %v369, %v370
  %v372 = vsel %vm322, %v361, 0.0
  %v373 = vadd.f32 %v371, %v372
  %v374 = vsel %vm322, %v362, 0.0
  %v375 = vadd.f32 %v373, %v374
  %v376 = vsel %vm322, %v363, 0.0
  %v377 = vadd.f32 %v375, %v376
  %v378 = vsel %vm322, %v364, 0.0
  %v379 = vadd.f32 %v377, %v378
  %v380 = vsel %vm322, %v365, 0.0
  %v381 = vadd.f32 %v379, %v380
  %v382 = vsel %vm322, %v366, 0.0
  %v383 = vadd.f32 %v381, %v382
  %v384 = vsel %vm322, %v367, 0.0
  %v385 = vadd.f32 %v383, %v384
  %v386 = vsel %vm322, %v368, 0.0
  %v387 = vadd.f32 %v385, %v386
  %v388 = vrot.slane %v387, 4
  %v389 = vadd.f32 %v387, %v388
  %v390 = vrot.slane %v389, 2
  %v391 = vadd.f32 %v389, %v390
  %v392 = vrot.slane %v391, 1
  %v393 = vadd.f32 %v391, %v392
  %v394 = vmul.f32 %v393, 0.0125
  %v395 = vadd.f32 %v394, 1e-05
  %v396 = vrsqrt.pop %v395
  %v397 = vmul.f32 %v396, %v395
  %v398 = vmul.f32 %v397, %v396
  %v399 = vmul.f32 0.5, %v398
  %v400 = vsub.f32 1.5, %v399
  %v401 = vmul.f32 %v396, %v400
  %vm402 = vweird.f32 %v395
  %vm403 = vweird.f32 %v396
  %vm404 = vmor %vm402, %vm403
  %v405 = vsel %vm404, %v396, %v401
  %v406 = vmul.f32 %v349, %v405
  %v407 = vmul.f32 %v350, %v405
  %v408 = vmul.f32 %v351, %v405
  %v409 = vmul.f32 %v352, %v405
  %v410 = vmul.f32 %v353, %v405
  %v411 = vmul.f32 %v354, %v405
  %v412 = vmul.f32 %v355, %v405
  %v413 = vmul.f32 %v356, %v405
  %v414 = vmul.f32 %v357, %v405
  %v415 = vmul.f32 %v358, %v405
  %417 = vset.pattern.permute.xlu0 0
  %418 = vperm.xlu0 %417, %v45
  %v419 = vpop.permute.xlu0 %418
  %422 = vset.pattern.permute.xlu0 0
  %423 = vperm.xlu0 %422, %v46
  %v424 = vpop.permute.xlu0 %423
  %427 = vset.pattern.permute.xlu0 0
  %428 = vperm.xlu0 %427, %v47
  %v429 = vpop.permute.xlu0 %428
  %432 = vset.pattern.permute.xlu0 0
  %433 = vperm.xlu0 %432, %v48
  %v434 = vpop.permute.xlu0 %433
  %437 = vset.pattern.permute.xlu0 0
  %438 = vperm.xlu0 %437, %v49
  %v439 = vpop.permute.xlu0 %438
  %442 = vset.pattern.permute.xlu0 0
  %443 = vperm.xlu0 %442, %v50
  %v444 = vpop.permute.xlu0 %443
  %447 = vset.pattern.permute.xlu0 0
  %448 = vperm.xlu0 %447, %v51
  %v449 = vpop.permute.xlu0 %448
  %452 = vset.pattern.permute.xlu0 0
  %453 = vperm.xlu0 %452, %v52
  %v454 = vpop.permute.xlu0 %453
  %457 = vset.pattern.permute.xlu0 0
  %458 = vperm.xlu0 %457, %v53
  %v459 = vpop.permute.xlu0 %458
  %462 = vset.pattern.permute.xlu0 0
  %463 = vperm.xlu0 %462, %v54
  %v464 = vpop.permute.xlu0 %463
  %v466 = vmul.f32 %v406, %v419
  %v467 = vmul.f32 %v407, %v424
  %v468 = vmul.f32 %v408, %v429
  %v469 = vmul.f32 %v409, %v434
  %v470 = vmul.f32 %v410, %v439
  %v471 = vmul.f32 %v411, %v444
  %v472 = vmul.f32 %v412, %v449
  %v473 = vmul.f32 %v413, %v454
  %v474 = vmul.f32 %v414, %v459
  %v475 = vmul.f32 %v415, %v464
  %477 = vset.pattern.permute.xlu0 0
  %478 = vperm.xlu0 %477, %v55
  %v479 = vpop.permute.xlu0 %478
  %482 = vset.pattern.permute.xlu0 0
  %483 = vperm.xlu0 %482, %v56
  %v484 = vpop.permute.xlu0 %483
  %487 = vset.pattern.permute.xlu0 0
  %488 = vperm.xlu0 %487, %v57
  %v489 = vpop.permute.xlu0 %488
  %492 = vset.pattern.permute.xlu0 0
  %493 = vperm.xlu0 %492, %v58
  %v494 = vpop.permute.xlu0 %493
  %497 = vset.pattern.permute.xlu0 0
  %498 = vperm.xlu0 %497, %v59
  %v499 = vpop.permute.xlu0 %498
  %502 = vset.pattern.permute.xlu0 0
  %503 = vperm.xlu0 %502, %v60
  %v504 = vpop.permute.xlu0 %503
  %507 = vset.pattern.permute.xlu0 0
  %508 = vperm.xlu0 %507, %v61
  %v509 = vpop.permute.xlu0 %508
  %512 = vset.pattern.permute.xlu0 0
  %513 = vperm.xlu0 %512, %v62
  %v514 = vpop.permute.xlu0 %513
  %517 = vset.pattern.permute.xlu0 0
  %518 = vperm.xlu0 %517, %v63
  %v519 = vpop.permute.xlu0 %518
  %522 = vset.pattern.permute.xlu0 0
  %523 = vperm.xlu0 %522, %v64
  %v524 = vpop.permute.xlu0 %523
  %v526 = vadd.f32 %v466, %v479
  %v527 = vadd.f32 %v467, %v484
  %v528 = vadd.f32 %v468, %v489
  %v529 = vadd.f32 %v469, %v494
  %v530 = vadd.f32 %v470, %v499
  %v531 = vadd.f32 %v471, %v504
  %v532 = vadd.f32 %v472, %v509
  %v533 = vadd.f32 %v473, %v514
  %v534 = vadd.f32 %v474, %v519
  %v535 = vadd.f32 %v475, %v524
  %v536 = vmax.f32 %v526, 0.0
  %v537 = vmax.f32 %v527, 0.0
  %v538 = vmax.f32 %v528, 0.0
  %v539 = vmax.f32 %v529, 0.0
  %v540 = vmax.f32 %v530, 0.0
  %v541 = vmax.f32 %v531, 0.0
  %v542 = vmax.f32 %v532, 0.0
  %v543 = vmax.f32 %v533, 0.0
  %v544 = vmax.f32 %v534, 0.0
  %v545 = vmax.f32 %v535, 0.0
  %v546 = vld [vmem:[%s2] sm:$0xff]
  %v547 = vld [vmem:[%s2 + $0x8] sm:$0xff]
  %v548 = vld [vmem:[%s2 + $0x10] sm:$0xff]
  %v549 = vld [vmem:[%s2 + $0x18] sm:$0xff]
  %v550 = vld [vmem:[%s2 + $0x20] sm:$0xff]
  %v551 = vld [vmem:[%s2 + $0x28] sm:$0xff]
  %v552 = vld [vmem:[%s2 + $0x30] sm:$0xff]
  %v553 = vld [vmem:[%s2 + $0x38] sm:$0xff]
  %555 = vset.pattern.permute.xlu0 0
  %556 = vperm.xlu0 %555, %v65
  %v557 = vpop.permute.xlu0 %556
  %560 = vset.pattern.permute.xlu0 0
  %561 = vperm.xlu0 %560, %v66
  %v562 = vpop.permute.xlu0 %561
  %565 = vset.pattern.permute.xlu0 0
  %566 = vperm.xlu0 %565, %v67
  %v567 = vpop.permute.xlu0 %566
  %570 = vset.pattern.permute.xlu0 0
  %571 = vperm.xlu0 %570, %v68
  %v572 = vpop.permute.xlu0 %571
  %575 = vset.pattern.permute.xlu0 0
  %576 = vperm.xlu0 %575, %v69
  %v577 = vpop.permute.xlu0 %576
  %580 = vset.pattern.permute.xlu0 0
  %581 = vperm.xlu0 %580, %v70
  %v582 = vpop.permute.xlu0 %581
  %585 = vset.pattern.permute.xlu0 0
  %586 = vperm.xlu0 %585, %v71
  %v587 = vpop.permute.xlu0 %586
  %590 = vset.pattern.permute.xlu0 0
  %591 = vperm.xlu0 %590, %v72
  %v592 = vpop.permute.xlu0 %591
  %vm594 = vcmask 654336
  %v596 = vsel %vm594, %v546, 0
  %v599 = vsel %vm594, %v547, 0
  %v602 = vsel %vm594, %v548, 0
  %v605 = vsel %vm594, %v549, 0
  %v608 = vsel %vm594, %v550, 0
  %v611 = vsel %vm594, %v551, 0
  %v614 = vsel %vm594, %v552, 0
  %v617 = vsel %vm594, %v553, 0
  %619 = vmatpush.msra.mxu0 0.0
  %620 = vmatpush.msra.mxu0 0.0
  %621 = vmatpush.msra.mxu0 0.0
  %622 = vmatpush.msra.mxu0 0.0
  %623 = vmatpush.msra.mxu0 0.0
  %624 = vmatpush.msra.mxu0 0.0
  %625 = vmatpush.msra.mxu0 %v545
  %626 = vmatpush.msra.mxu0 %v544
  %627 = vmatpush.msra.mxu0 %v543
  %628 = vmatpush.msra.mxu0 %v542
  %629 = vmatpush.msra.mxu0 %v541
  %630 = vmatpush.msra.mxu0 %v540
  %631 = vmatpush.msra.mxu0 %v539
  %632 = vmatpush.msra.mxu0 %v538
  %633 = vmatpush.msra.mxu0 %v537
  %634 = vmatpush.msra.mxu0 %v536
  %635 = vmatmul.f32.gmra.mxu0 %v596
  %v636 = vpop.f32.mrf.mxu0
  %v637 = vadd.f32 %v557, %v636
  %638 = vmatmul.f32.gmra.mxu0 %v599
  %v639 = vpop.f32.mrf.mxu0
  %v640 = vadd.f32 %v562, %v639
  %641 = vmatmul.f32.gmra.mxu0 %v602
  %v642 = vpop.f32.mrf.mxu0
  %v643 = vadd.f32 %v567, %v642
  %644 = vmatmul.f32.gmra.mxu0 %v605
  %v645 = vpop.f32.mrf.mxu0
  %v646 = vadd.f32 %v572, %v645
  %647 = vmatmul.f32.gmra.mxu0 %v608
  %v648 = vpop.f32.mrf.mxu0
  %v649 = vadd.f32 %v577, %v648
  %650 = vmatmul.f32.gmra.mxu0 %v611
  %v651 = vpop.f32.mrf.mxu0
  %v652 = vadd.f32 %v582, %v651
  %653 = vmatmul.f32.gmra.mxu0 %v614
  %v654 = vpop.f32.mrf.mxu0
  %v655 = vadd.f32 %v587, %v654
  %656 = vmatmul.f32.gmra.mxu0 %v617
  %v657 = vpop.f32.mrf.mxu0
  %v658 = vadd.f32 %v592, %v657
  %659 = vdwg.mxu0
  %v660 = vsel %vm322, %v637, 0.0
  %v661 = vsel %vm322, %v640, 0.0
  %v662 = vadd.f32 %v660, %v661
  %v663 = vsel %vm322, %v643, 0.0
  %v664 = vadd.f32 %v662, %v663
  %v665 = vsel %vm322, %v646, 0.0
  %v666 = vadd.f32 %v664, %v665
  %v667 = vsel %vm322, %v649, 0.0
  %v668 = vadd.f32 %v666, %v667
  %v669 = vsel %vm322, %v652, 0.0
  %v670 = vadd.f32 %v668, %v669
  %v671 = vsel %vm322, %v655, 0.0
  %v672 = vadd.f32 %v670, %v671
  %v673 = vsel %vm322, %v658, 0.0
  %v674 = vadd.f32 %v672, %v673
  %v675 = vrot.slane %v674, 4
  %v676 = vadd.f32 %v674, %v675
  %v677 = vrot.slane %v676, 2
  %v678 = vadd.f32 %v676, %v677
  %v679 = vrot.slane %v678, 1
  %v680 = vadd.f32 %v678, %v679
  %v681 = vmul.f32 %v680, 0.015625
  %v682 = vsub.f32 %v637, %v681
  %v683 = vsub.f32 %v640, %v681
  %v684 = vsub.f32 %v643, %v681
  %v685 = vsub.f32 %v646, %v681
  %v686 = vsub.f32 %v649, %v681
  %v687 = vsub.f32 %v652, %v681
  %v688 = vsub.f32 %v655, %v681
  %v689 = vsub.f32 %v658, %v681
  %v690 = vmul.f32 %v682, %v682
  %v691 = vmul.f32 %v683, %v683
  %v692 = vmul.f32 %v684, %v684
  %v693 = vmul.f32 %v685, %v685
  %v694 = vmul.f32 %v686, %v686
  %v695 = vmul.f32 %v687, %v687
  %v696 = vmul.f32 %v688, %v688
  %v697 = vmul.f32 %v689, %v689
  %v698 = vsel %vm322, %v690, 0.0
  %v699 = vsel %vm322, %v691, 0.0
  %v700 = vadd.f32 %v698, %v699
  %v701 = vsel %vm322, %v692, 0.0
  %v702 = vadd.f32 %v700, %v701
  %v703 = vsel %vm322, %v693, 0.0
  %v704 = vadd.f32 %v702, %v703
  %v705 = vsel %vm322, %v694, 0.0
  %v706 = vadd.f32 %v704, %v705
  %v707 = vsel %vm322, %v695, 0.0
  %v708 = vadd.f32 %v706, %v707
  %v709 = vsel %vm322, %v696, 0.0
  %v710 = vadd.f32 %v708, %v709
  %v711 = vsel %vm322, %v697, 0.0
  %v712 = vadd.f32 %v710, %v711
  %v713 = vrot.slane %v712, 4
  %v714 = vadd.f32 %v712, %v713
  %v715 = vrot.slane %v714, 2
  %v716 = vadd.f32 %v714, %v715
  %v717 = vrot.slane %v716, 1
  %v718 = vadd.f32 %v716, %v717
  %v719 = vmul.f32 %v718, 0.015625
  %v720 = vadd.f32 %v719, 1e-05
  %v721 = vrsqrt.pop %v720
  %v722 = vmul.f32 %v721, %v720
  %v723 = vmul.f32 %v722, %v721
  %v724 = vmul.f32 0.5, %v723
  %v725 = vsub.f32 1.5, %v724
  %v726 = vmul.f32 %v721, %v725
  %vm727 = vweird.f32 %v720
  %vm728 = vweird.f32 %v721
  %vm729 = vmor %vm727, %vm728
  %v730 = vsel %vm729, %v721, %v726
  %v731 = vmul.f32 %v682, %v730
  %v732 = vmul.f32 %v683, %v730
  %v733 = vmul.f32 %v684, %v730
  %v734 = vmul.f32 %v685, %v730
  %v735 = vmul.f32 %v686, %v730
  %v736 = vmul.f32 %v687, %v730
  %v737 = vmul.f32 %v688, %v730
  %v738 = vmul.f32 %v689, %v730
  %740 = vset.pattern.permute.xlu0 0
  %741 = vperm.xlu0 %740, %v73
  %v742 = vpop.permute.xlu0 %741
  %745 = vset.pattern.permute.xlu0 0
  %746 = vperm.xlu0 %745, %v74
  %v747 = vpop.permute.xlu0 %746
  %750 = vset.pattern.permute.xlu0 0
  %751 = vperm.xlu0 %750, %v75
  %v752 = vpop.permute.xlu0 %751
  %755 = vset.pattern.permute.xlu0 0
  %756 = vperm.xlu0 %755, %v76
  %v757 = vpop.permute.xlu0 %756
  %760 = vset.pattern.permute.xlu0 0
  %761 = vperm.xlu0 %760, %v77
  %v762 = vpop.permute.xlu0 %761
  %765 = vset.pattern.permute.xlu0 0
  %766 = vperm.xlu0 %765, %v78
  %v767 = vpop.permute.xlu0 %766
  %770 = vset.pattern.permute.xlu0 0
  %771 = vperm.xlu0 %770, %v79
  %v772 = vpop.permute.xlu0 %771
  %775 = vset.pattern.permute.xlu0 0
  %776 = vperm.xlu0 %775, %v80
  %v777 = vpop.permute.xlu0 %776
  %v779 = vmul.f32 %v731, %v742
  %v780 = vmul.f32 %v732, %v747
  %v781 = vmul.f32 %v733, %v752
  %v782 = vmul.f32 %v734, %v757
  %v783 = vmul.f32 %v735, %v762
  %v784 = vmul.f32 %v736, %v767
  %v785 = vmul.f32 %v737, %v772
  %v786 = vmul.f32 %v738, %v777
  %788 = vset.pattern.permute.xlu0 0
  %789 = vperm.xlu0 %788, %v81
  %v790 = vpop.permute.xlu0 %789
  %793 = vset.pattern.permute.xlu0 0
  %794 = vperm.xlu0 %793, %v82
  %v795 = vpop.permute.xlu0 %794
  %798 = vset.pattern.permute.xlu0 0
  %799 = vperm.xlu0 %798, %v83
  %v800 = vpop.permute.xlu0 %799
  %803 = vset.pattern.permute.xlu0 0
  %804 = vperm.xlu0 %803, %v84
  %v805 = vpop.permute.xlu0 %804
  %808 = vset.pattern.permute.xlu0 0
  %809 = vperm.xlu0 %808, %v85
  %v810 = vpop.permute.xlu0 %809
  %813 = vset.pattern.permute.xlu0 0
  %814 = vperm.xlu0 %813, %v86
  %v815 = vpop.permute.xlu0 %814
  %818 = vset.pattern.permute.xlu0 0
  %819 = vperm.xlu0 %818, %v87
  %v820 = vpop.permute.xlu0 %819
  %823 = vset.pattern.permute.xlu0 0
  %824 = vperm.xlu0 %823, %v88
  %v825 = vpop.permute.xlu0 %824
  %v827 = vadd.f32 %v779, %v790
  %v828 = vadd.f32 %v780, %v795
  %v829 = vadd.f32 %v781, %v800
  %v830 = vadd.f32 %v782, %v805
  %v831 = vadd.f32 %v783, %v810
  %v832 = vadd.f32 %v784, %v815
  %v833 = vadd.f32 %v785, %v820
  %v834 = vadd.f32 %v786, %v825
  %v835 = vmax.f32 %v827, 0.0
  %v836 = vmax.f32 %v828, 0.0
  %v837 = vmax.f32 %v829, 0.0
  %v838 = vmax.f32 %v830, 0.0
  %v839 = vmax.f32 %v831, 0.0
  %v840 = vmax.f32 %v832, 0.0
  %v841 = vmax.f32 %v833, 0.0
  %v842 = vmax.f32 %v834, 0.0
  %v843 = vld [vmem:[%s3] sm:$0xff]
  %v844 = vld [vmem:[%s3 + $0x8] sm:$0xff]
  %v845 = vld [vmem:[%s3 + $0x10] sm:$0xff]
  %v846 = vld [vmem:[%s3 + $0x18] sm:$0xff]
  %v847 = vld [vmem:[%s3 + $0x20] sm:$0xff]
  %v848 = vld [vmem:[%s3 + $0x28] sm:$0xff]
  %850 = vset.pattern.permute.xlu0 0
  %851 = vperm.xlu0 %850, %v89
  %v852 = vpop.permute.xlu0 %851
  %855 = vset.pattern.permute.xlu0 0
  %856 = vperm.xlu0 %855, %v90
  %v857 = vpop.permute.xlu0 %856
  %860 = vset.pattern.permute.xlu0 0
  %861 = vperm.xlu0 %860, %v91
  %v862 = vpop.permute.xlu0 %861
  %865 = vset.pattern.permute.xlu0 0
  %866 = vperm.xlu0 %865, %v92
  %v867 = vpop.permute.xlu0 %866
  %870 = vset.pattern.permute.xlu0 0
  %871 = vperm.xlu0 %870, %v93
  %v872 = vpop.permute.xlu0 %871
  %875 = vset.pattern.permute.xlu0 0
  %876 = vperm.xlu0 %875, %v94
  %v877 = vpop.permute.xlu0 %876
  %vm879 = vcmask 523264
  %v881 = vsel %vm879, %v843, 0
  %v884 = vsel %vm879, %v844, 0
  %v887 = vsel %vm879, %v845, 0
  %v890 = vsel %vm879, %v846, 0
  %v893 = vsel %vm879, %v847, 0
  %v896 = vsel %vm879, %v848, 0
  %898 = vmatpush.msra.mxu0 0.0
  %899 = vmatpush.msra.mxu0 0.0
  %900 = vmatpush.msra.mxu0 0.0
  %901 = vmatpush.msra.mxu0 0.0
  %902 = vmatpush.msra.mxu0 0.0
  %903 = vmatpush.msra.mxu0 0.0
  %904 = vmatpush.msra.mxu0 0.0
  %905 = vmatpush.msra.mxu0 0.0
  %906 = vmatpush.msra.mxu0 %v842
  %907 = vmatpush.msra.mxu0 %v841
  %908 = vmatpush.msra.mxu0 %v840
  %909 = vmatpush.msra.mxu0 %v839
  %910 = vmatpush.msra.mxu0 %v838
  %911 = vmatpush.msra.mxu0 %v837
  %912 = vmatpush.msra.mxu0 %v836
  %913 = vmatpush.msra.mxu0 %v835
  %914 = vmatmul.f32.gmra.mxu0 %v881
  %v915 = vpop.f32.mrf.mxu0
  %v916 = vadd.f32 %v852, %v915
  %917 = vmatmul.f32.gmra.mxu0 %v884
  %v918 = vpop.f32.mrf.mxu0
  %v919 = vadd.f32 %v857, %v918
  %920 = vmatmul.f32.gmra.mxu0 %v887
  %v921 = vpop.f32.mrf.mxu0
  %v922 = vadd.f32 %v862, %v921
  %923 = vmatmul.f32.gmra.mxu0 %v890
  %v924 = vpop.f32.mrf.mxu0
  %v925 = vadd.f32 %v867, %v924
  %926 = vmatmul.f32.gmra.mxu0 %v893
  %v927 = vpop.f32.mrf.mxu0
  %v928 = vadd.f32 %v872, %v927
  %929 = vmatmul.f32.gmra.mxu0 %v896
  %v930 = vpop.f32.mrf.mxu0
  %v931 = vadd.f32 %v877, %v930
  %932 = vdwg.mxu0
  %v933 = vsel %vm322, %v916, 0.0
  %v934 = vsel %vm322, %v919, 0.0
  %v935 = vadd.f32 %v933, %v934
  %v936 = vsel %vm322, %v922, 0.0
  %v937 = vadd.f32 %v935, %v936
  %v938 = vsel %vm322, %v925, 0.0
  %v939 = vadd.f32 %v937, %v938
  %v940 = vsel %vm322, %v928, 0.0
  %v941 = vadd.f32 %v939, %v940
  %v942 = vsel %vm322, %v931, 0.0
  %v943 = vadd.f32 %v941, %v942
  %v944 = vrot.slane %v943, 4
  %v945 = vadd.f32 %v943, %v944
  %v946 = vrot.slane %v945, 2
  %v947 = vadd.f32 %v945, %v946
  %v948 = vrot.slane %v947, 1
  %v949 = vadd.f32 %v947, %v948
  %v950 = vmul.f32 %v949, 0.020833334
  %v951 = vsub.f32 %v916, %v950
  %v952 = vsub.f32 %v919, %v950
  %v953 = vsub.f32 %v922, %v950
  %v954 = vsub.f32 %v925, %v950
  %v955 = vsub.f32 %v928, %v950
  %v956 = vsub.f32 %v931, %v950
  %v957 = vmul.f32 %v951, %v951
  %v958 = vmul.f32 %v952, %v952
  %v959 = vmul.f32 %v953, %v953
  %v960 = vmul.f32 %v954, %v954
  %v961 = vmul.f32 %v955, %v955
  %v962 = vmul.f32 %v956, %v956
  %v963 = vsel %vm322, %v957, 0.0
  %v964 = vsel %vm322, %v958, 0.0
  %v965 = vadd.f32 %v963, %v964
  %v966 = vsel %vm322, %v959, 0.0
  %v967 = vadd.f32 %v965, %v966
  %v968 = vsel %vm322, %v960, 0.0
  %v969 = vadd.f32 %v967, %v968
  %v970 = vsel %vm322, %v961, 0.0
  %v971 = vadd.f32 %v969, %v970
  %v972 = vsel %vm322, %v962, 0.0
  %v973 = vadd.f32 %v971, %v972
  %v974 = vrot.slane %v973, 4
  %v975 = vadd.f32 %v973, %v974
  %v976 = vrot.slane %v975, 2
  %v977 = vadd.f32 %v975, %v976
  %v978 = vrot.slane %v977, 1
  %v979 = vadd.f32 %v977, %v978
  %v980 = vmul.f32 %v979, 0.020833334
  %v981 = vadd.f32 %v980, 1e-05
  %v982 = vrsqrt.pop %v981
  %v983 = vmul.f32 %v982, %v981
  %v984 = vmul.f32 %v983, %v982
  %v985 = vmul.f32 0.5, %v984
  %v986 = vsub.f32 1.5, %v985
  %v987 = vmul.f32 %v982, %v986
  %vm988 = vweird.f32 %v981
  %vm989 = vweird.f32 %v982
  %vm990 = vmor %vm988, %vm989
  %v991 = vsel %vm990, %v982, %v987
  %v992 = vmul.f32 %v951, %v991
  %v993 = vmul.f32 %v952, %v991
  %v994 = vmul.f32 %v953, %v991
  %v995 = vmul.f32 %v954, %v991
  %v996 = vmul.f32 %v955, %v991
  %v997 = vmul.f32 %v956, %v991
  %999 = vset.pattern.permute.xlu0 0
  %1000 = vperm.xlu0 %999, %v95
  %v1001 = vpop.permute.xlu0 %1000
  %1004 = vset.pattern.permute.xlu0 0
  %1005 = vperm.xlu0 %1004, %v96
  %v1006 = vpop.permute.xlu0 %1005
  %1009 = vset.pattern.permute.xlu0 0
  %1010 = vperm.xlu0 %1009, %v97
  %v1011 = vpop.permute.xlu0 %1010
  %1014 = vset.pattern.permute.xlu0 0
  %1015 = vperm.xlu0 %1014, %v98
  %v1016 = vpop.permute.xlu0 %1015
  %1019 = vset.pattern.permute.xlu0 0
  %1020 = vperm.xlu0 %1019, %v99
  %v1021 = vpop.permute.xlu0 %1020
  %1024 = vset.pattern.permute.xlu0 0
  %1025 = vperm.xlu0 %1024, %v100
  %v1026 = vpop.permute.xlu0 %1025
  %v1028 = vmul.f32 %v992, %v1001
  %v1029 = vmul.f32 %v993, %v1006
  %v1030 = vmul.f32 %v994, %v1011
  %v1031 = vmul.f32 %v995, %v1016
  %v1032 = vmul.f32 %v996, %v1021
  %v1033 = vmul.f32 %v997, %v1026
  %1035 = vset.pattern.permute.xlu0 0
  %1036 = vperm.xlu0 %1035, %v101
  %v1037 = vpop.permute.xlu0 %1036
  %1040 = vset.pattern.permute.xlu0 0
  %1041 = vperm.xlu0 %1040, %v102
  %v1042 = vpop.permute.xlu0 %1041
  %1045 = vset.pattern.permute.xlu0 0
  %1046 = vperm.xlu0 %1045, %v103
  %v1047 = vpop.permute.xlu0 %1046
  %1050 = vset.pattern.permute.xlu0 0
  %1051 = vperm.xlu0 %1050, %v104
  %v1052 = vpop.permute.xlu0 %1051
  %1055 = vset.pattern.permute.xlu0 0
  %1056 = vperm.xlu0 %1055, %v105
  %v1057 = vpop.permute.xlu0 %1056
  %1060 = vset.pattern.permute.xlu0 0
  %1061 = vperm.xlu0 %1060, %v106
  %v1062 = vpop.permute.xlu0 %1061
  %v1064 = vadd.f32 %v1028, %v1037
  %v1065 = vadd.f32 %v1029, %v1042
  %v1066 = vadd.f32 %v1030, %v1047
  %v1067 = vadd.f32 %v1031, %v1052
  %v1068 = vadd.f32 %v1032, %v1057
  %v1069 = vadd.f32 %v1033, %v1062
  %v1070 = vmax.f32 %v1064, 0.0
  %v1071 = vmax.f32 %v1065, 0.0
  %v1072 = vmax.f32 %v1066, 0.0
  %v1073 = vmax.f32 %v1067, 0.0
  %v1074 = vmax.f32 %v1068, 0.0
  %v1075 = vmax.f32 %v1069, 0.0
  %v1076 = vld [vmem:[%s4] sm:$0x3]
  %1078 = vset.pattern.permute.xlu0 0
  %1079 = vperm.xlu0 %1078, %v107
  %v1080 = vpop.permute.xlu0 %1079
  %vm1082 = vcmask 392192
  %v1084 = vsel %vm1082, %v1076, 0
  %1086 = vmatpush.msra.mxu0 0.0
  %1087 = vmatpush.msra.mxu0 0.0
  %1088 = vmatpush.msra.mxu0 0.0
  %1089 = vmatpush.msra.mxu0 0.0
  %1090 = vmatpush.msra.mxu0 0.0
  %1091 = vmatpush.msra.mxu0 0.0
  %1092 = vmatpush.msra.mxu0 0.0
  %1093 = vmatpush.msra.mxu0 0.0
  %1094 = vmatpush.msra.mxu0 0.0
  %1095 = vmatpush.msra.mxu0 0.0
  %1096 = vmatpush.msra.mxu0 %v1075
  %1097 = vmatpush.msra.mxu0 %v1074
  %1098 = vmatpush.msra.mxu0 %v1073
  %1099 = vmatpush.msra.mxu0 %v1072
  %1100 = vmatpush.msra.mxu0 %v1071
  %1101 = vmatpush.msra.mxu0 %v1070
  %1102 = vmatmul.f32.gmra.mxu0 %v1084
  %v1103 = vpop.f32.mrf.mxu0
  %v1104 = vadd.f32 %v1080, %v1103
  %1105 = vdwg.mxu0
  %v1106 = vld [vmem:[%s5] sm:$0xff]
  %v1107 = vld [vmem:[%s5 + $0x8] sm:$0xff]
  %v1108 = vld [vmem:[%s5 + $0x10] sm:$0xff]
  %v1109 = vld [vmem:[%s5 + $0x18] sm:$0xff]
  %v1110 = vld [vmem:[%s5 + $0x20] sm:$0xff]
  %v1111 = vld [vmem:[%s5 + $0x28] sm:$0xff]
  %1113 = vset.pattern.permute.xlu0 0
  %1114 = vperm.xlu0 %1113, %v108
  %v1115 = vpop.permute.xlu0 %1114
  %1118 = vset.pattern.permute.xlu0 0
  %1119 = vperm.xlu0 %1118, %v109
  %v1120 = vpop.permute.xlu0 %1119
  %1123 = vset.pattern.permute.xlu0 0
  %1124 = vperm.xlu0 %1123, %v110
  %v1125 = vpop.permute.xlu0 %1124
  %1128 = vset.pattern.permute.xlu0 0
  %1129 = vperm.xlu0 %1128, %v111
  %v1130 = vpop.permute.xlu0 %1129
  %1133 = vset.pattern.permute.xlu0 0
  %1134 = vperm.xlu0 %1133, %v112
  %v1135 = vpop.permute.xlu0 %1134
  %1138 = vset.pattern.permute.xlu0 0
  %1139 = vperm.xlu0 %1138, %v113
  %v1140 = vpop.permute.xlu0 %1139
  %vm1142 = vcmask 15360
  %v1144 = vsel %vm1142, %v1106, 0
  %v1147 = vsel %vm1142, %v1107, 0
  %v1150 = vsel %vm1142, %v1108, 0
  %v1153 = vsel %vm1142, %v1109, 0
  %v1156 = vsel %vm1142, %v1110, 0
  %v1159 = vsel %vm1142, %v1111, 0
  %vm1161 = vcmask 1041408
  %v1163 = vsel %vm1161, %v1104, 0
  %1165 = vmatpush.msra.mxu0 0.0
  %1166 = vmatpush.msra.mxu0 0.0
  %1167 = vmatpush.msra.mxu0 0.0
  %1168 = vmatpush.msra.mxu0 0.0
  %1169 = vmatpush.msra.mxu0 0.0
  %1170 = vmatpush.msra.mxu0 0.0
  %1171 = vmatpush.msra.mxu0 0.0
  %1172 = vmatpush.msra.mxu0 0.0
  %1173 = vmatpush.msra.mxu0 0.0
  %1174 = vmatpush.msra.mxu0 0.0
  %1175 = vmatpush.msra.mxu0 0.0
  %1176 = vmatpush.msra.mxu0 0.0
  %1177 = vmatpush.msra.mxu0 0.0
  %1178 = vmatpush.msra.mxu0 0.0
  %1179 = vmatpush.msra.mxu0 0.0
  %1180 = vmatpush.msra.mxu0 %v1163
  %1181 = vmatmul.f32.gmra.mxu0 %v1144
  %v1182 = vpop.f32.mrf.mxu0
  %v1183 = vadd.f32 %v1115, %v1182
  %1184 = vmatmul.f32.gmra.mxu0 %v1147
  %v1185 = vpop.f32.mrf.mxu0
  %v1186 = vadd.f32 %v1120, %v1185
  %1187 = vmatmul.f32.gmra.mxu0 %v1150
  %v1188 = vpop.f32.mrf.mxu0
  %v1189 = vadd.f32 %v1125, %v1188
  %1190 = vmatmul.f32.gmra.mxu0 %v1153
  %v1191 = vpop.f32.mrf.mxu0
  %v1192 = vadd.f32 %v1130, %v1191
  %1193 = vmatmul.f32.gmra.mxu0 %v1156
  %v1194 = vpop.f32.mrf.mxu0
  %v1195 = vadd.f32 %v1135, %v1194
  %1196 = vmatmul.f32.gmra.mxu0 %v1159
  %v1197 = vpop.f32.mrf.mxu0
  %v1198 = vadd.f32 %v1140, %v1197
  %1199 = vdwg.mxu0
  %v1200 = vsel %vm322, %v1183, 0.0
  %v1201 = vsel %vm322, %v1186, 0.0
  %v1202 = vadd.f32 %v1200, %v1201
  %v1203 = vsel %vm322, %v1189, 0.0
  %v1204 = vadd.f32 %v1202, %v1203
  %v1205 = vsel %vm322, %v1192, 0.0
  %v1206 = vadd.f32 %v1204, %v1205
  %v1207 = vsel %vm322, %v1195, 0.0
  %v1208 = vadd.f32 %v1206, %v1207
  %v1209 = vsel %vm322, %v1198, 0.0
  %v1210 = vadd.f32 %v1208, %v1209
  %v1211 = vrot.slane %v1210, 4
  %v1212 = vadd.f32 %v1210, %v1211
  %v1213 = vrot.slane %v1212, 2
  %v1214 = vadd.f32 %v1212, %v1213
  %v1215 = vrot.slane %v1214, 1
  %v1216 = vadd.f32 %v1214, %v1215
  %v1217 = vmul.f32 %v1216, 0.020833334
  %v1218 = vsub.f32 %v1183, %v1217
  %v1219 = vsub.f32 %v1186, %v1217
  %v1220 = vsub.f32 %v1189, %v1217
  %v1221 = vsub.f32 %v1192, %v1217
  %v1222 = vsub.f32 %v1195, %v1217
  %v1223 = vsub.f32 %v1198, %v1217
  %v1224 = vmul.f32 %v1218, %v1218
  %v1225 = vmul.f32 %v1219, %v1219
  %v1226 = vmul.f32 %v1220, %v1220
  %v1227 = vmul.f32 %v1221, %v1221
  %v1228 = vmul.f32 %v1222, %v1222
  %v1229 = vmul.f32 %v1223, %v1223
  %v1230 = vsel %vm322, %v1224, 0.0
  %v1231 = vsel %vm322, %v1225, 0.0
  %v1232 = vadd.f32 %v1230, %v1231
  %v1233 = vsel %vm322, %v1226, 0.0
  %v1234 = vadd.f32 %v1232, %v1233
  %v1235 = vsel %vm322, %v1227, 0.0
  %v1236 = vadd.f32 %v1234, %v1235
  %v1237 = vsel %vm322, %v1228, 0.0
  %v1238 = vadd.f32 %v1236, %v1237
  %v1239 = vsel %vm322, %v1229, 0.0
  %v1240 = vadd.f32 %v1238, %v1239
  %v1241 = vrot.slane %v1240, 4
  %v1242 = vadd.f32 %v1240, %v1241
  %v1243 = vrot.slane %v1242, 2
  %v1244 = vadd.f32 %v1242, %v1243
  %v1245 = vrot.slane %v1244, 1
  %v1246 = vadd.f32 %v1244, %v1245
  %v1247 = vmul.f32 %v1246, 0.020833334
  %v1248 = vadd.f32 %v1247, 1e-05
  %v1249 = vrsqrt.pop %v1248
  %v1250 = vmul.f32 %v1249, %v1248
  %v1251 = vmul.f32 %v1250, %v1249
  %v1252 = vmul.f32 0.5, %v1251
  %v1253 = vsub.f32 1.5, %v1252
  %v1254 = vmul.f32 %v1249, %v1253
  %vm1255 = vweird.f32 %v1248
  %vm1256 = vweird.f32 %v1249
  %vm1257 = vmor %vm1255, %vm1256
  %v1258 = vsel %vm1257, %v1249, %v1254
  %v1259 = vmul.f32 %v1218, %v1258
  %v1260 = vmul.f32 %v1219, %v1258
  %v1261 = vmul.f32 %v1220, %v1258
  %v1262 = vmul.f32 %v1221, %v1258
  %v1263 = vmul.f32 %v1222, %v1258
  %v1264 = vmul.f32 %v1223, %v1258
  %1266 = vset.pattern.permute.xlu0 0
  %1267 = vperm.xlu0 %1266, %v114
  %v1268 = vpop.permute.xlu0 %1267
  %1271 = vset.pattern.permute.xlu0 0
  %1272 = vperm.xlu0 %1271, %v115
  %v1273 = vpop.permute.xlu0 %1272
  %1276 = vset.pattern.permute.xlu0 0
  %1277 = vperm.xlu0 %1276, %v116
  %v1278 = vpop.permute.xlu0 %1277
  %1281 = vset.pattern.permute.xlu0 0
  %1282 = vperm.xlu0 %1281, %v117
  %v1283 = vpop.permute.xlu0 %1282
  %1286 = vset.pattern.permute.xlu0 0
  %1287 = vperm.xlu0 %1286, %v118
  %v1288 = vpop.permute.xlu0 %1287
  %1291 = vset.pattern.permute.xlu0 0
  %1292 = vperm.xlu0 %1291, %v119
  %v1293 = vpop.permute.xlu0 %1292
  %v1295 = vmul.f32 %v1259, %v1268
  %v1296 = vmul.f32 %v1260, %v1273
  %v1297 = vmul.f32 %v1261, %v1278
  %v1298 = vmul.f32 %v1262, %v1283
  %v1299 = vmul.f32 %v1263, %v1288
  %v1300 = vmul.f32 %v1264, %v1293
  %1302 = vset.pattern.permute.xlu0 0
  %1303 = vperm.xlu0 %1302, %v120
  %v1304 = vpop.permute.xlu0 %1303
  %1307 = vset.pattern.permute.xlu0 0
  %1308 = vperm.xlu0 %1307, %v121
  %v1309 = vpop.permute.xlu0 %1308
  %1312 = vset.pattern.permute.xlu0 0
  %1313 = vperm.xlu0 %1312, %v122
  %v1314 = vpop.permute.xlu0 %1313
  %1317 = vset.pattern.permute.xlu0 0
  %1318 = vperm.xlu0 %1317, %v123
  %v1319 = vpop.permute.xlu0 %1318
  %1322 = vset.pattern.permute.xlu0 0
  %1323 = vperm.xlu0 %1322, %v124
  %v1324 = vpop.permute.xlu0 %1323
  %1327 = vset.pattern.permute.xlu0 0
  %1328 = vperm.xlu0 %1327, %v125
  %v1329 = vpop.permute.xlu0 %1328
  %v1331 = vadd.f32 %v1295, %v1304
  %v1332 = vadd.f32 %v1296, %v1309
  %v1333 = vadd.f32 %v1297, %v1314
  %v1334 = vadd.f32 %v1298, %v1319
  %v1335 = vadd.f32 %v1299, %v1324
  %v1336 = vadd.f32 %v1300, %v1329
  %v1337 = vmax.f32 %v1331, 0.0
  %v1338 = vmax.f32 %v1332, 0.0
  %v1339 = vmax.f32 %v1333, 0.0
  %v1340 = vmax.f32 %v1334, 0.0
  %v1341 = vmax.f32 %v1335, 0.0
  %v1342 = vmax.f32 %v1336, 0.0
  %v1343 = vld [vmem:[%s6] sm:$0xff]
  %v1344 = vld [vmem:[%s6 + $0x8] sm:$0xff]
  %v1345 = vld [vmem:[%s6 + $0x10] sm:$0xff]
  %v1346 = vld [vmem:[%s6 + $0x18] sm:$0xff]
  %v1347 = vld [vmem:[%s6 + $0x20] sm:$0xff]
  %v1348 = vld [vmem:[%s6 + $0x28] sm:$0xff]
  %v1349 = vld [vmem:[%s6 + $0x30] sm:$0xff]
  %v1350 = vld [vmem:[%s6 + $0x38] sm:$0xff]
  %1352 = vset.pattern.permute.xlu0 0
  %1353 = vperm.xlu0 %1352, %v126
  %v1354 = vpop.permute.xlu0 %1353
  %1357 = vset.pattern.permute.xlu0 0
  %1358 = vperm.xlu0 %1357, %v127
  %v1359 = vpop.permute.xlu0 %1358
  %1362 = vset.pattern.permute.xlu0 0
  %1363 = vperm.xlu0 %1362, %v128
  %v1364 = vpop.permute.xlu0 %1363
  %1367 = vset.pattern.permute.xlu0 0
  %1368 = vperm.xlu0 %1367, %v129
  %v1369 = vpop.permute.xlu0 %1368
  %1372 = vset.pattern.permute.xlu0 0
  %1373 = vperm.xlu0 %1372, %v130
  %v1374 = vpop.permute.xlu0 %1373
  %1377 = vset.pattern.permute.xlu0 0
  %1378 = vperm.xlu0 %1377, %v131
  %v1379 = vpop.permute.xlu0 %1378
  %1382 = vset.pattern.permute.xlu0 0
  %1383 = vperm.xlu0 %1382, %v132
  %v1384 = vpop.permute.xlu0 %1383
  %1387 = vset.pattern.permute.xlu0 0
  %1388 = vperm.xlu0 %1387, %v133
  %v1389 = vpop.permute.xlu0 %1388
  %v1392 = vsel %vm1082, %v1343, 0
  %v1395 = vsel %vm1082, %v1344, 0
  %v1398 = vsel %vm1082, %v1345, 0
  %v1401 = vsel %vm1082, %v1346, 0
  %v1404 = vsel %vm1082, %v1347, 0
  %v1407 = vsel %vm1082, %v1348, 0
  %v1410 = vsel %vm1082, %v1349, 0
  %v1413 = vsel %vm1082, %v1350, 0
  %1415 = vmatpush.msra.mxu0 0.0
  %1416 = vmatpush.msra.mxu0 0.0
  %1417 = vmatpush.msra.mxu0 0.0
  %1418 = vmatpush.msra.mxu0 0.0
  %1419 = vmatpush.msra.mxu0 0.0
  %1420 = vmatpush.msra.mxu0 0.0
  %1421 = vmatpush.msra.mxu0 0.0
  %1422 = vmatpush.msra.mxu0 0.0
  %1423 = vmatpush.msra.mxu0 0.0
  %1424 = vmatpush.msra.mxu0 0.0
  %1425 = vmatpush.msra.mxu0 %v1342
  %1426 = vmatpush.msra.mxu0 %v1341
  %1427 = vmatpush.msra.mxu0 %v1340
  %1428 = vmatpush.msra.mxu0 %v1339
  %1429 = vmatpush.msra.mxu0 %v1338
  %1430 = vmatpush.msra.mxu0 %v1337
  %1431 = vmatmul.f32.gmra.mxu0 %v1392
  %v1432 = vpop.f32.mrf.mxu0
  %v1433 = vadd.f32 %v1354, %v1432
  %1434 = vmatmul.f32.gmra.mxu0 %v1395
  %v1435 = vpop.f32.mrf.mxu0
  %v1436 = vadd.f32 %v1359, %v1435
  %1437 = vmatmul.f32.gmra.mxu0 %v1398
  %v1438 = vpop.f32.mrf.mxu0
  %v1439 = vadd.f32 %v1364, %v1438
  %1440 = vmatmul.f32.gmra.mxu0 %v1401
  %v1441 = vpop.f32.mrf.mxu0
  %v1442 = vadd.f32 %v1369, %v1441
  %1443 = vmatmul.f32.gmra.mxu0 %v1404
  %v1444 = vpop.f32.mrf.mxu0
  %v1445 = vadd.f32 %v1374, %v1444
  %1446 = vmatmul.f32.gmra.mxu0 %v1407
  %v1447 = vpop.f32.mrf.mxu0
  %v1448 = vadd.f32 %v1379, %v1447
  %1449 = vmatmul.f32.gmra.mxu0 %v1410
  %v1450 = vpop.f32.mrf.mxu0
  %v1451 = vadd.f32 %v1384, %v1450
  %1452 = vmatmul.f32.gmra.mxu0 %v1413
  %v1453 = vpop.f32.mrf.mxu0
  %v1454 = vadd.f32 %v1389, %v1453
  %1455 = vdwg.mxu0
  %v1456 = vsel %vm322, %v1433, 0.0
  %v1457 = vsel %vm322, %v1436, 0.0
  %v1458 = vadd.f32 %v1456, %v1457
  %v1459 = vsel %vm322, %v1439, 0.0
  %v1460 = vadd.f32 %v1458, %v1459
  %v1461 = vsel %vm322, %v1442, 0.0
  %v1462 = vadd.f32 %v1460, %v1461
  %v1463 = vsel %vm322, %v1445, 0.0
  %v1464 = vadd.f32 %v1462, %v1463
  %v1465 = vsel %vm322, %v1448, 0.0
  %v1466 = vadd.f32 %v1464, %v1465
  %v1467 = vsel %vm322, %v1451, 0.0
  %v1468 = vadd.f32 %v1466, %v1467
  %v1469 = vsel %vm322, %v1454, 0.0
  %v1470 = vadd.f32 %v1468, %v1469
  %v1471 = vrot.slane %v1470, 4
  %v1472 = vadd.f32 %v1470, %v1471
  %v1473 = vrot.slane %v1472, 2
  %v1474 = vadd.f32 %v1472, %v1473
  %v1475 = vrot.slane %v1474, 1
  %v1476 = vadd.f32 %v1474, %v1475
  %v1477 = vmul.f32 %v1476, 0.015625
  %v1478 = vsub.f32 %v1433, %v1477
  %v1479 = vsub.f32 %v1436, %v1477
  %v1480 = vsub.f32 %v1439, %v1477
  %v1481 = vsub.f32 %v1442, %v1477
  %v1482 = vsub.f32 %v1445, %v1477
  %v1483 = vsub.f32 %v1448, %v1477
  %v1484 = vsub.f32 %v1451, %v1477
  %v1485 = vsub.f32 %v1454, %v1477
  %v1486 = vmul.f32 %v1478, %v1478
  %v1487 = vmul.f32 %v1479, %v1479
  %v1488 = vmul.f32 %v1480, %v1480
  %v1489 = vmul.f32 %v1481, %v1481
  %v1490 = vmul.f32 %v1482, %v1482
  %v1491 = vmul.f32 %v1483, %v1483
  %v1492 = vmul.f32 %v1484, %v1484
  %v1493 = vmul.f32 %v1485, %v1485
  %v1494 = vsel %vm322, %v1486, 0.0
  %v1495 = vsel %vm322, %v1487, 0.0
  %v1496 = vadd.f32 %v1494, %v1495
  %v1497 = vsel %vm322, %v1488, 0.0
  %v1498 = vadd.f32 %v1496, %v1497
  %v1499 = vsel %vm322, %v1489, 0.0
  %v1500 = vadd.f32 %v1498, %v1499
  %v1501 = vsel %vm322, %v1490, 0.0
  %v1502 = vadd.f32 %v1500, %v1501
  %v1503 = vsel %vm322, %v1491, 0.0
  %v1504 = vadd.f32 %v1502, %v1503
  %v1505 = vsel %vm322, %v1492, 0.0
  %v1506 = vadd.f32 %v1504, %v1505
  %v1507 = vsel %vm322, %v1493, 0.0
  %v1508 = vadd.f32 %v1506, %v1507
  %v1509 = vrot.slane %v1508, 4
  %v1510 = vadd.f32 %v1508, %v1509
  %v1511 = vrot.slane %v1510, 2
  %v1512 = vadd.f32 %v1510, %v1511
  %v1513 = vrot.slane %v1512, 1
  %v1514 = vadd.f32 %v1512, %v1513
  %v1515 = vmul.f32 %v1514, 0.015625
  %v1516 = vadd.f32 %v1515, 1e-05
  %v1517 = vrsqrt.pop %v1516
  %v1518 = vmul.f32 %v1517, %v1516
  %v1519 = vmul.f32 %v1518, %v1517
  %v1520 = vmul.f32 0.5, %v1519
  %v1521 = vsub.f32 1.5, %v1520
  %v1522 = vmul.f32 %v1517, %v1521
  %vm1523 = vweird.f32 %v1516
  %vm1524 = vweird.f32 %v1517
  %vm1525 = vmor %vm1523, %vm1524
  %v1526 = vsel %vm1525, %v1517, %v1522
  %v1527 = vmul.f32 %v1478, %v1526
  %v1528 = vmul.f32 %v1479, %v1526
  %v1529 = vmul.f32 %v1480, %v1526
  %v1530 = vmul.f32 %v1481, %v1526
  %v1531 = vmul.f32 %v1482, %v1526
  %v1532 = vmul.f32 %v1483, %v1526
  %v1533 = vmul.f32 %v1484, %v1526
  %v1534 = vmul.f32 %v1485, %v1526
  %1536 = vset.pattern.permute.xlu0 0
  %1537 = vperm.xlu0 %1536, %v134
  %v1538 = vpop.permute.xlu0 %1537
  %1541 = vset.pattern.permute.xlu0 0
  %1542 = vperm.xlu0 %1541, %v135
  %v1543 = vpop.permute.xlu0 %1542
  %1546 = vset.pattern.permute.xlu0 0
  %1547 = vperm.xlu0 %1546, %v136
  %v1548 = vpop.permute.xlu0 %1547
  %1551 = vset.pattern.permute.xlu0 0
  %1552 = vperm.xlu0 %1551, %v137
  %v1553 = vpop.permute.xlu0 %1552
  %1556 = vset.pattern.permute.xlu0 0
  %1557 = vperm.xlu0 %1556, %v138
  %v1558 = vpop.permute.xlu0 %1557
  %1561 = vset.pattern.permute.xlu0 0
  %1562 = vperm.xlu0 %1561, %v139
  %v1563 = vpop.permute.xlu0 %1562
  %1566 = vset.pattern.permute.xlu0 0
  %1567 = vperm.xlu0 %1566, %v140
  %v1568 = vpop.permute.xlu0 %1567
  %1571 = vset.pattern.permute.xlu0 0
  %1572 = vperm.xlu0 %1571, %v141
  %v1573 = vpop.permute.xlu0 %1572
  %v1575 = vmul.f32 %v1527, %v1538
  %v1576 = vmul.f32 %v1528, %v1543
  %v1577 = vmul.f32 %v1529, %v1548
  %v1578 = vmul.f32 %v1530, %v1553
  %v1579 = vmul.f32 %v1531, %v1558
  %v1580 = vmul.f32 %v1532, %v1563
  %v1581 = vmul.f32 %v1533, %v1568
  %v1582 = vmul.f32 %v1534, %v1573
  %1584 = vset.pattern.permute.xlu0 0
  %1585 = vperm.xlu0 %1584, %v142
  %v1586 = vpop.permute.xlu0 %1585
  %1589 = vset.pattern.permute.xlu0 0
  %1590 = vperm.xlu0 %1589, %v143
  %v1591 = vpop.permute.xlu0 %1590
  %1594 = vset.pattern.permute.xlu0 0
  %1595 = vperm.xlu0 %1594, %v144
  %v1596 = vpop.permute.xlu0 %1595
  %1599 = vset.pattern.permute.xlu0 0
  %1600 = vperm.xlu0 %1599, %v145
  %v1601 = vpop.permute.xlu0 %1600
  %1604 = vset.pattern.permute.xlu0 0
  %1605 = vperm.xlu0 %1604, %v146
  %v1606 = vpop.permute.xlu0 %1605
  %1609 = vset.pattern.permute.xlu0 0
  %1610 = vperm.xlu0 %1609, %v147
  %v1611 = vpop.permute.xlu0 %1610
  %1614 = vset.pattern.permute.xlu0 0
  %1615 = vperm.xlu0 %1614, %v148
  %v1616 = vpop.permute.xlu0 %1615
  %1619 = vset.pattern.permute.xlu0 0
  %1620 = vperm.xlu0 %1619, %v149
  %v1621 = vpop.permute.xlu0 %1620
  %v1623 = vadd.f32 %v1575, %v1586
  %v1624 = vadd.f32 %v1576, %v1591
  %v1625 = vadd.f32 %v1577, %v1596
  %v1626 = vadd.f32 %v1578, %v1601
  %v1627 = vadd.f32 %v1579, %v1606
  %v1628 = vadd.f32 %v1580, %v1611
  %v1629 = vadd.f32 %v1581, %v1616
  %v1630 = vadd.f32 %v1582, %v1621
  %v1631 = vmax.f32 %v1623, 0.0
  %v1632 = vmax.f32 %v1624, 0.0
  %v1633 = vmax.f32 %v1625, 0.0
  %v1634 = vmax.f32 %v1626, 0.0
  %v1635 = vmax.f32 %v1627, 0.0
  %v1636 = vmax.f32 %v1628, 0.0
  %v1637 = vmax.f32 %v1629, 0.0
  %v1638 = vmax.f32 %v1630, 0.0
  %v1639 = vld [vmem:[%s7] sm:$0xff]
  %v1640 = vld [vmem:[%s7 + $0x8] sm:$0xff]
  %v1641 = vld [vmem:[%s7 + $0x10] sm:$0xff]
  %v1642 = vld [vmem:[%s7 + $0x18] sm:$0xff]
  %v1643 = vld [vmem:[%s7 + $0x20] sm:$0xff]
  %v1644 = vld [vmem:[%s7 + $0x28] sm:$0xff]
  %v1645 = vld [vmem:[%s7 + $0x30] sm:$0xff]
  %v1646 = vld [vmem:[%s7 + $0x38] sm:$0xff]
  %v1647 = vld [vmem:[%s7 + $0x40] sm:$0xff]
  %v1648 = vld [vmem:[%s7 + $0x48] sm:$0xff]
  %1650 = vset.pattern.permute.xlu0 0
  %1651 = vperm.xlu0 %1650, %v150
  %v1652 = vpop.permute.xlu0 %1651
  %1655 = vset.pattern.permute.xlu0 0
  %1656 = vperm.xlu0 %1655, %v151
  %v1657 = vpop.permute.xlu0 %1656
  %1660 = vset.pattern.permute.xlu0 0
  %1661 = vperm.xlu0 %1660, %v152
  %v1662 = vpop.permute.xlu0 %1661
  %1665 = vset.pattern.permute.xlu0 0
  %1666 = vperm.xlu0 %1665, %v153
  %v1667 = vpop.permute.xlu0 %1666
  %1670 = vset.pattern.permute.xlu0 0
  %1671 = vperm.xlu0 %1670, %v154
  %v1672 = vpop.permute.xlu0 %1671
  %1675 = vset.pattern.permute.xlu0 0
  %1676 = vperm.xlu0 %1675, %v155
  %v1677 = vpop.permute.xlu0 %1676
  %1680 = vset.pattern.permute.xlu0 0
  %1681 = vperm.xlu0 %1680, %v156
  %v1682 = vpop.permute.xlu0 %1681
  %1685 = vset.pattern.permute.xlu0 0
  %1686 = vperm.xlu0 %1685, %v157
  %v1687 = vpop.permute.xlu0 %1686
  %1690 = vset.pattern.permute.xlu0 0
  %1691 = vperm.xlu0 %1690, %v158
  %v1692 = vpop.permute.xlu0 %1691
  %1695 = vset.pattern.permute.xlu0 0
  %1696 = vperm.xlu0 %1695, %v159
  %v1697 = vpop.permute.xlu0 %1696
  %v1700 = vsel %vm879, %v1639, 0
  %v1703 = vsel %vm879, %v1640, 0
  %v1706 = vsel %vm879, %v1641, 0
  %v1709 = vsel %vm879, %v1642, 0
  %v1712 = vsel %vm879, %v1643, 0
  %v1715 = vsel %vm879, %v1644, 0
  %v1718 = vsel %vm879, %v1645, 0
  %v1721 = vsel %vm879, %v1646, 0
  %v1724 = vsel %vm879, %v1647, 0
  %v1727 = vsel %vm879, %v1648, 0
  %1729 = vmatpush.msra.mxu0 0.0
  %1730 = vmatpush.msra.mxu0 0.0
  %1731 = vmatpush.msra.mxu0 0.0
  %1732 = vmatpush.msra.mxu0 0.0
  %1733 = vmatpush.msra.mxu0 0.0
  %1734 = vmatpush.msra.mxu0 0.0
  %1735 = vmatpush.msra.mxu0 0.0
  %1736 = vmatpush.msra.mxu0 0.0
  %1737 = vmatpush.msra.mxu0 %v1638
  %1738 = vmatpush.msra.mxu0 %v1637
  %1739 = vmatpush.msra.mxu0 %v1636
  %1740 = vmatpush.msra.mxu0 %v1635
  %1741 = vmatpush.msra.mxu0 %v1634
  %1742 = vmatpush.msra.mxu0 %v1633
  %1743 = vmatpush.msra.mxu0 %v1632
  %1744 = vmatpush.msra.mxu0 %v1631
  %1745 = vmatmul.f32.gmra.mxu0 %v1700
  %v1746 = vpop.f32.mrf.mxu0
  %v1747 = vadd.f32 %v1652, %v1746
  %1748 = vmatmul.f32.gmra.mxu0 %v1703
  %v1749 = vpop.f32.mrf.mxu0
  %v1750 = vadd.f32 %v1657, %v1749
  %1751 = vmatmul.f32.gmra.mxu0 %v1706
  %v1752 = vpop.f32.mrf.mxu0
  %v1753 = vadd.f32 %v1662, %v1752
  %1754 = vmatmul.f32.gmra.mxu0 %v1709
  %v1755 = vpop.f32.mrf.mxu0
  %v1756 = vadd.f32 %v1667, %v1755
  %1757 = vmatmul.f32.gmra.mxu0 %v1712
  %v1758 = vpop.f32.mrf.mxu0
  %v1759 = vadd.f32 %v1672, %v1758
  %1760 = vmatmul.f32.gmra.mxu0 %v1715
  %v1761 = vpop.f32.mrf.mxu0
  %v1762 = vadd.f32 %v1677, %v1761
  %1763 = vmatmul.f32.gmra.mxu0 %v1718
  %v1764 = vpop.f32.mrf.mxu0
  %v1765 = vadd.f32 %v1682, %v1764
  %1766 = vmatmul.f32.gmra.mxu0 %v1721
  %v1767 = vpop.f32.mrf.mxu0
  %v1768 = vadd.f32 %v1687, %v1767
  %1769 = vmatmul.f32.gmra.mxu0 %v1724
  %v1770 = vpop.f32.mrf.mxu0
  %v1771 = vadd.f32 %v1692, %v1770
  %1772 = vmatmul.f32.gmra.mxu0 %v1727
  %v1773 = vpop.f32.mrf.mxu0
  %v1774 = vadd.f32 %v1697, %v1773
  %1775 = vdwg.mxu0
  %v1776 = vsel %vm322, %v1747, 0.0
  %v1777 = vsel %vm322, %v1750, 0.0
  %v1778 = vadd.f32 %v1776, %v1777
  %v1779 = vsel %vm322, %v1753, 0.0
  %v1780 = vadd.f32 %v1778, %v1779
  %v1781 = vsel %vm322, %v1756, 0.0
  %v1782 = vadd.f32 %v1780, %v1781
  %v1783 = vsel %vm322, %v1759, 0.0
  %v1784 = vadd.f32 %v1782, %v1783
  %v1785 = vsel %vm322, %v1762, 0.0
  %v1786 = vadd.f32 %v1784, %v1785
  %v1787 = vsel %vm322, %v1765, 0.0
  %v1788 = vadd.f32 %v1786, %v1787
  %v1789 = vsel %vm322, %v1768, 0.0
  %v1790 = vadd.f32 %v1788, %v1789
  %v1791 = vsel %vm322, %v1771, 0.0
  %v1792 = vadd.f32 %v1790, %v1791
  %v1793 = vsel %vm322, %v1774, 0.0
  %v1794 = vadd.f32 %v1792, %v1793
  %v1795 = vrot.slane %v1794, 4
  %v1796 = vadd.f32 %v1794, %v1795
  %v1797 = vrot.slane %v1796, 2
  %v1798 = vadd.f32 %v1796, %v1797
  %v1799 = vrot.slane %v1798, 1
  %v1800 = vadd.f32 %v1798, %v1799
  %v1801 = vmul.f32 %v1800, 0.0125
  %v1802 = vsub.f32 %v1747, %v1801
  %v1803 = vsub.f32 %v1750, %v1801
  %v1804 = vsub.f32 %v1753, %v1801
  %v1805 = vsub.f32 %v1756, %v1801
  %v1806 = vsub.f32 %v1759, %v1801
  %v1807 = vsub.f32 %v1762, %v1801
  %v1808 = vsub.f32 %v1765, %v1801
  %v1809 = vsub.f32 %v1768, %v1801
  %v1810 = vsub.f32 %v1771, %v1801
  %v1811 = vsub.f32 %v1774, %v1801
  %v1812 = vmul.f32 %v1802, %v1802
  %v1813 = vmul.f32 %v1803, %v1803
  %v1814 = vmul.f32 %v1804, %v1804
  %v1815 = vmul.f32 %v1805, %v1805
  %v1816 = vmul.f32 %v1806, %v1806
  %v1817 = vmul.f32 %v1807, %v1807
  %v1818 = vmul.f32 %v1808, %v1808
  %v1819 = vmul.f32 %v1809, %v1809
  %v1820 = vmul.f32 %v1810, %v1810
  %v1821 = vmul.f32 %v1811, %v1811
  %v1822 = vsel %vm322, %v1812, 0.0
  %v1823 = vsel %vm322, %v1813, 0.0
  %v1824 = vadd.f32 %v1822, %v1823
  %v1825 = vsel %vm322, %v1814, 0.0
  %v1826 = vadd.f32 %v1824, %v1825
  %v1827 = vsel %vm322, %v1815, 0.0
  %v1828 = vadd.f32 %v1826, %v1827
  %v1829 = vsel %vm322, %v1816, 0.0
  %v1830 = vadd.f32 %v1828, %v1829
  %v1831 = vsel %vm322, %v1817, 0.0
  %v1832 = vadd.f32 %v1830, %v1831
  %v1833 = vsel %vm322, %v1818, 0.0
  %v1834 = vadd.f32 %v1832, %v1833
  %v1835 = vsel %vm322, %v1819, 0.0
  %v1836 = vadd.f32 %v1834, %v1835
  %v1837 = vsel %vm322, %v1820, 0.0
  %v1838 = vadd.f32 %v1836, %v1837
  %v1839 = vsel %vm322, %v1821, 0.0
  %v1840 = vadd.f32 %v1838, %v1839
  %v1841 = vrot.slane %v1840, 4
  %v1842 = vadd.f32 %v1840, %v1841
  %v1843 = vrot.slane %v1842, 2
  %v1844 = vadd.f32 %v1842, %v1843
  %v1845 = vrot.slane %v1844, 1
  %v1846 = vadd.f32 %v1844, %v1845
  %v1847 = vmul.f32 %v1846, 0.0125
  %v1848 = vadd.f32 %v1847, 1e-05
  %v1849 = vrsqrt.pop %v1848
  %v1850 = vmul.f32 %v1849, %v1848
  %v1851 = vmul.f32 %v1850, %v1849
  %v1852 = vmul.f32 0.5, %v1851
  %v1853 = vsub.f32 1.5, %v1852
  %v1854 = vmul.f32 %v1849, %v1853
  %vm1855 = vweird.f32 %v1848
  %vm1856 = vweird.f32 %v1849
  %vm1857 = vmor %vm1855, %vm1856
  %v1858 = vsel %vm1857, %v1849, %v1854
  %v1859 = vmul.f32 %v1802, %v1858
  %v1860 = vmul.f32 %v1803, %v1858
  %v1861 = vmul.f32 %v1804, %v1858
  %v1862 = vmul.f32 %v1805, %v1858
  %v1863 = vmul.f32 %v1806, %v1858
  %v1864 = vmul.f32 %v1807, %v1858
  %v1865 = vmul.f32 %v1808, %v1858
  %v1866 = vmul.f32 %v1809, %v1858
  %v1867 = vmul.f32 %v1810, %v1858
  %v1868 = vmul.f32 %v1811, %v1858
  %1870 = vset.pattern.permute.xlu0 0
  %1871 = vperm.xlu0 %1870, %v160
  %v1872 = vpop.permute.xlu0 %1871
  %1875 = vset.pattern.permute.xlu0 0
  %1876 = vperm.xlu0 %1875, %v161
  %v1877 = vpop.permute.xlu0 %1876
  %1880 = vset.pattern.permute.xlu0 0
  %1881 = vperm.xlu0 %1880, %v162
  %v1882 = vpop.permute.xlu0 %1881
  %1885 = vset.pattern.permute.xlu0 0
  %1886 = vperm.xlu0 %1885, %v163
  %v1887 = vpop.permute.xlu0 %1886
  %1890 = vset.pattern.permute.xlu0 0
  %1891 = vperm.xlu0 %1890, %v164
  %v1892 = vpop.permute.xlu0 %1891
  %1895 = vset.pattern.permute.xlu0 0
  %1896 = vperm.xlu0 %1895, %v165
  %v1897 = vpop.permute.xlu0 %1896
  %1900 = vset.pattern.permute.xlu0 0
  %1901 = vperm.xlu0 %1900, %v166
  %v1902 = vpop.permute.xlu0 %1901
  %1905 = vset.pattern.permute.xlu0 0
  %1906 = vperm.xlu0 %1905, %v167
  %v1907 = vpop.permute.xlu0 %1906
  %1910 = vset.pattern.permute.xlu0 0
  %1911 = vperm.xlu0 %1910, %v168
  %v1912 = vpop.permute.xlu0 %1911
  %1915 = vset.pattern.permute.xlu0 0
  %1916 = vperm.xlu0 %1915, %v169
  %v1917 = vpop.permute.xlu0 %1916
  %v1919 = vmul.f32 %v1859, %v1872
  %v1920 = vmul.f32 %v1860, %v1877
  %v1921 = vmul.f32 %v1861, %v1882
  %v1922 = vmul.f32 %v1862, %v1887
  %v1923 = vmul.f32 %v1863, %v1892
  %v1924 = vmul.f32 %v1864, %v1897
  %v1925 = vmul.f32 %v1865, %v1902
  %v1926 = vmul.f32 %v1866, %v1907
  %v1927 = vmul.f32 %v1867, %v1912
  %v1928 = vmul.f32 %v1868, %v1917
  %1930 = vset.pattern.permute.xlu0 0
  %1931 = vperm.xlu0 %1930, %v170
  %v1932 = vpop.permute.xlu0 %1931
  %1935 = vset.pattern.permute.xlu0 0
  %1936 = vperm.xlu0 %1935, %v171
  %v1937 = vpop.permute.xlu0 %1936
  %1940 = vset.pattern.permute.xlu0 0
  %1941 = vperm.xlu0 %1940, %v172
  %v1942 = vpop.permute.xlu0 %1941
  %1945 = vset.pattern.permute.xlu0 0
  %1946 = vperm.xlu0 %1945, %v173
  %v1947 = vpop.permute.xlu0 %1946
  %1950 = vset.pattern.permute.xlu0 0
  %1951 = vperm.xlu0 %1950, %v174
  %v1952 = vpop.permute.xlu0 %1951
  %1955 = vset.pattern.permute.xlu0 0
  %1956 = vperm.xlu0 %1955, %v175
  %v1957 = vpop.permute.xlu0 %1956
  %1960 = vset.pattern.permute.xlu0 0
  %1961 = vperm.xlu0 %1960, %v176
  %v1962 = vpop.permute.xlu0 %1961
  %1965 = vset.pattern.permute.xlu0 0
  %1966 = vperm.xlu0 %1965, %v177
  %v1967 = vpop.permute.xlu0 %1966
  %1970 = vset.pattern.permute.xlu0 0
  %1971 = vperm.xlu0 %1970, %v178
  %v1972 = vpop.permute.xlu0 %1971
  %1975 = vset.pattern.permute.xlu0 0
  %1976 = vperm.xlu0 %1975, %v179
  %v1977 = vpop.permute.xlu0 %1976
  %v1979 = vadd.f32 %v1919, %v1932
  %v1980 = vadd.f32 %v1920, %v1937
  %v1981 = vadd.f32 %v1921, %v1942
  %v1982 = vadd.f32 %v1922, %v1947
  %v1983 = vadd.f32 %v1923, %v1952
  %v1984 = vadd.f32 %v1924, %v1957
  %v1985 = vadd.f32 %v1925, %v1962
  %v1986 = vadd.f32 %v1926, %v1967
  %v1987 = vadd.f32 %v1927, %v1972
  %v1988 = vadd.f32 %v1928, %v1977
  %v1989 = vmax.f32 %v1979, 0.0
  %v1990 = vmax.f32 %v1980, 0.0
  %v1991 = vmax.f32 %v1981, 0.0
  %v1992 = vmax.f32 %v1982, 0.0
  %v1993 = vmax.f32 %v1983, 0.0
  %v1994 = vmax.f32 %v1984, 0.0
  %v1995 = vmax.f32 %v1985, 0.0
  %v1996 = vmax.f32 %v1986, 0.0
  %v1997 = vmax.f32 %v1987, 0.0
  %v1998 = vmax.f32 %v1988, 0.0
  %v1999 = vld [vmem:[%s8] sm:$0xff]
  %v2000 = vld [vmem:[%s8 + $0x8] sm:$0xff]
  %2002 = vset.pattern.permute.xlu0 0
  %2003 = vperm.xlu0 %2002, %v180
  %v2004 = vpop.permute.xlu0 %2003
  %2007 = vset.pattern.permute.xlu0 0
  %2008 = vperm.xlu0 %2007, %v181
  %v2009 = vpop.permute.xlu0 %2008
  %v2012 = vsel %vm594, %v1999, 0
  %v2015 = vsel %vm594, %v2000, 0
  %2017 = vmatpush.msra.mxu0 0.0
  %2018 = vmatpush.msra.mxu0 0.0
  %2019 = vmatpush.msra.mxu0 0.0
  %2020 = vmatpush.msra.mxu0 0.0
  %2021 = vmatpush.msra.mxu0 0.0
  %2022 = vmatpush.msra.mxu0 0.0
  %2023 = vmatpush.msra.mxu0 %v1998
  %2024 = vmatpush.msra.mxu0 %v1997
  %2025 = vmatpush.msra.mxu0 %v1996
  %2026 = vmatpush.msra.mxu0 %v1995
  %2027 = vmatpush.msra.mxu0 %v1994
  %2028 = vmatpush.msra.mxu0 %v1993
  %2029 = vmatpush.msra.mxu0 %v1992
  %2030 = vmatpush.msra.mxu0 %v1991
  %2031 = vmatpush.msra.mxu0 %v1990
  %2032 = vmatpush.msra.mxu0 %v1989
  %2033 = vmatmul.f32.gmra.mxu0 %v2012
  %v2034 = vpop.f32.mrf.mxu0
  %v2035 = vadd.f32 %v2004, %v2034
  %2036 = vmatmul.f32.gmra.mxu0 %v2015
  %v2037 = vpop.f32.mrf.mxu0
  %v2038 = vadd.f32 %v2009, %v2037
  %2039 = vdwg.mxu0
  %v2040 = vsel %vm322, %v2035, -inf
  %v2041 = vsel %vm322, %v2038, -inf
  %v2042 = vmax.f32 %v2040, %v2041
  %v2043 = vrot.slane %v2042, 4
  %v2044 = vmax.f32 %v2042, %v2043
  %v2045 = vrot.slane %v2044, 2
  %v2046 = vmax.f32 %v2044, %v2045
  %v2047 = vrot.slane %v2046, 1
  %v2048 = vmax.f32 %v2046, %v2047
  %v2049 = vsub.f32 %v2035, %v2048
  %v2050 = vsub.f32 %v2038, %v2048
  %v2051 = vmul.f32 %v2049, 1.442695
  %v2052 = vpow.pop %v2051
  %v2053 = vmul.f32 %v2050, 1.442695
  %v2054 = vpow.pop %v2053
  %v2055 = vsel %vm322, %v2052, 0.0
  %v2056 = vsel %vm322, %v2054, 0.0
  %v2057 = vadd.f32 %v2055, %v2056
  %v2058 = vrot.slane %v2057, 4
  %v2059 = vadd.f32 %v2057, %v2058
  %v2060 = vrot.slane %v2059, 2
  %v2061 = vadd.f32 %v2059, %v2060
  %v2062 = vrot.slane %v2061, 1
  %v2063 = vadd.f32 %v2061, %v2062
  %v2064 = vrcp.pop %v2063
  %v2065 = vmul.f32 %v2063, %v2064
  %v2066 = vsub.f32 1.0, %v2065
  %v2067 = vmul.f32 %v2064, %v2066
  %v2068 = vadd.f32 %v2064, %v2067
  %vm2069 = vweird.f32 %v2063
  %vm2070 = vweird.f32 %v2064
  %vm2071 = vmor %vm2069, %vm2070
  %v2072 = vsel %vm2071, %v2064, %v2068
  %v2073 = vand.u32 2147483647, %v2063
  %vm2074 = vcmp.eq.f32.partialorder %v2073, 8.507059e+37
  %v2075 = vand.u32 %v2063, 2147483648
  %v2076 = vor.u32 1.1754944e-38, %v2075
  %v2077 = vsel %vm2074, %v2076, %v2072
  %v2078 = vmul.f32 1.0, %v2077
  %v2079 = vmul.f32 %v2052, %v2078
  %v2080 = vmul.f32 %v2054, %v2078
  %2081 = vst.msk [vmem:[%s10] sm:$0xff] %vm322, %v2079
  %2082 = vst.msk [vmem:[%s10 + $0x8] sm:$0xff] %vm322, %v2080
  %vm2083 = vcmask 58368
  %2084 = vst.msk [vmem:[%s10 + $0x10] sm:$0x3] %vm2083, %v1104
  // Predicated region
  $region42: #{wae_forward.1} parent=0 // pred_check
    _
  $region43: #{wae_forward.1} parent=0 // pred_check_branch
    %2086 = sbr.rel (0) target = $region45
  $region44: #{wae_forward.1} parent=0 // pred_region
    _
  $region45: #{wae_forward.1} parent=0 // pred_fallthru
    _
  // Predicated region
  $region46: #{wae_forward.1} parent=0 // pred_check
    _
  $region47: #{wae_forward.1} parent=0 // pred_check_branch
    %2088 = sbr.rel (0) target = $region49
  $region48: #{wae_forward.1} parent=0 // pred_region
    _
  $region49: #{wae_forward.1} parent=0 // pred_fallthru
    _

</llo_original>
